<compile_context>
chip_gen: v7x
topology: tpu7x:2x2x1
jax: 0.10.0
libtpu: 0.0.40
codegen_flags: <defaults>
</compile_context>

<pallas_src>
import functools

import jax
import jax.numpy as jnp
from jax.experimental import pallas as pl
from jax.experimental.pallas import tpu as pltpu

_LANE = 128
_VMEM_LIMIT = 32 * 1024 * 1024          # scoped VMEM limit, safe on v5e/v6e/v7x
_TARGET_BLOCK_BYTES = 8 * 1024 * 1024   # per input buffer (x2 for double buffering)


def _round_up(a, b):
    return -(-a // b) * b


def _pick_tile_rows(n_rows, row_bytes):
    """Largest row tile (multiple of 8) fitting the VMEM budget, capped so the
    grid has >= 2 blocks when possible (v7x megacore / pipeline overlap)."""
    if n_rows <= 8:
        return int(n_rows)  # full-dim block
    t = max(8, (_TARGET_BLOCK_BYTES // max(row_bytes, 1)) // 8 * 8)
    if n_rows >= 16:
        t = min(t, max(8, _round_up(-(-n_rows // 2), 8)))
    t = min(t, _round_up(n_rows, 8))
    return int(t)


def _std_packed_kernel(x_ref, o_ref, *, seg_len, num_seg):
    """x_ref: (tile_r, num_seg*seg_len); each row packs num_seg original rows
    along the 128-lane axis. Two-pass unbiased std per segment via MXU."""
    x = x_ref[...].astype(jnp.float32)
    w = num_seg * seg_len

    lane = jax.lax.broadcasted_iota(jnp.int32, (w, num_seg), 0)
    seg = jax.lax.broadcasted_iota(jnp.int32, (w, num_seg), 1)
    m = ((lane >= seg * seg_len) & (lane < (seg + 1) * seg_len)).astype(jnp.float32)

    seg_t = jax.lax.broadcasted_iota(jnp.int32, (num_seg, w), 0)
    lane_t = jax.lax.broadcasted_iota(jnp.int32, (num_seg, w), 1)
    mt = ((lane_t >= seg_t * seg_len) & (lane_t < (seg_t + 1) * seg_len)).astype(jnp.float32)

    hi = jax.lax.Precision.HIGHEST
    s = jnp.dot(x, m, precision=hi, preferred_element_type=jnp.float32)        # (tile_r, g)
    mean = s * (1.0 / seg_len)
    mean_b = jnp.dot(mean, mt, precision=hi, preferred_element_type=jnp.float32)  # (tile_r, w)
    d = x - mean_b
    ss = jnp.dot(d * d, m, precision=hi, preferred_element_type=jnp.float32)   # (tile_r, g)
    var = jnp.maximum(ss * (1.0 / (seg_len - 1)), 0.0)
    o_ref[...] = jnp.sqrt(var).astype(o_ref.dtype)


def _std_blocked_kernel(x_ref, o_ref, s_acc, ss_acc, *, n_total):
    """Blocked-T path: accumulate sum and sum-of-squares across the T grid axis
    in VMEM scratch; finalize (single-pass variance) on the last T step."""
    k = pl.program_id(1)

    @pl.when(k == 0)
    def _():
        s_acc[...] = jnp.zeros_like(s_acc)
        ss_acc[...] = jnp.zeros_like(ss_acc)

    x = x_ref[...].astype(jnp.float32)
    s_acc[...] = s_acc[...] + jnp.sum(x, axis=-1, keepdims=True)
    ss_acc[...] = ss_acc[...] + jnp.sum(x * x, axis=-1, keepdims=True)

    @pl.when(k == pl.num_programs(1) - 1)
    def _():
        s = s_acc[...]
        ss = ss_acc[...]
        var = (ss - s * s * (1.0 / n_total)) * (1.0 / (n_total - 1))
        var = jnp.maximum(var, 0.0)
        o_ref[...] = jnp.sqrt(var).astype(o_ref.dtype)


def _std_rows_packed(x2d, seg_len, num_seg):
    """x2d: (Rp, num_seg*seg_len) -> (Rp*num_seg,) unbiased std per original row."""
    rp, w = x2d.shape
    tile_r = _pick_tile_rows(rp, w * x2d.dtype.itemsize)
    grid = (pl.cdiv(rp, tile_r),)
    out = pl.pallas_call(
        functools.partial(_std_packed_kernel, seg_len=seg_len, num_seg=num_seg),
        out_shape=jax.ShapeDtypeStruct((rp, num_seg), x2d.dtype),
        grid_spec=pltpu.PrefetchScalarGridSpec(
            num_scalar_prefetch=0,
            grid=grid,
            in_specs=[pl.BlockSpec((tile_r, w), lambda i: (i, 0))],
            out_specs=pl.BlockSpec((tile_r, num_seg), lambda i: (i, 0)),
        ),
        compiler_params=pltpu.CompilerParams(
            dimension_semantics=("parallel",),
            vmem_limit_bytes=_VMEM_LIMIT,
        ),
    )(x2d)
    return out.reshape(rp * num_seg)


def _std_rows_blocked(x2d, n_total, tile_t):
    """x2d: (R, T_padded) with T_padded % tile_t == 0 -> (R,) unbiased std."""
    r, t_pad = x2d.shape
    tile_r = _pick_tile_rows(r, tile_t * x2d.dtype.itemsize)
    grid = (pl.cdiv(r, tile_r), t_pad // tile_t)
    out = pl.pallas_call(
        functools.partial(_std_blocked_kernel, n_total=n_total),
        out_shape=jax.ShapeDtypeStruct((r, 1), x2d.dtype),
        grid_spec=pltpu.PrefetchScalarGridSpec(
            num_scalar_prefetch=0,
            grid=grid,
            in_specs=[pl.BlockSpec((tile_r, tile_t), lambda i, k: (i, k))],
            out_specs=pl.BlockSpec((tile_r, 1), lambda i, k: (i, 0)),
            scratch_shapes=[pltpu.VMEM((tile_r, 1), jnp.float32),
                            pltpu.VMEM((tile_r, 1), jnp.float32)],
        ),
        compiler_params=pltpu.CompilerParams(
            dimension_semantics=("parallel", "arbitrary"),
            vmem_limit_bytes=_VMEM_LIMIT,
        ),
    )(x2d)
    return out.reshape(r)


def std_layer(x, dim, *, max_single_t=65536, t_block=8192):
    """Equivalent of StdLayer(dim).forward(x): x.std(dim=dim, keepdim=True)
    (unbiased / correction=1, like torch's default)."""
    dim = dim % x.ndim
    n = x.shape[dim]
    out_shape = x.shape[:dim] + (1,) + x.shape[dim + 1:]
    if n < 2:
        # torch's unbiased std over a length-1 dim is NaN.
        return jnp.full(out_shape, jnp.nan, dtype=x.dtype)

    # TODO(synk): when `dim` is not the trailing axis this moveaxis is an extra
    # HBM transpose pass; an in-kernel sublane-axis reduction would avoid it.
    xt = jnp.moveaxis(x, dim, -1)  # no-op when dim is already the last axis
    lead = xt.shape[:-1]
    r = 1
    for s in lead:
        r *= int(s)
    x2d = xt.reshape(r, n)

    if n <= _LANE and _LANE % n == 0 and r % (_LANE // n) == 0:
        # Pack g = 128 // n original rows per 128-lane packed row (free,
        # contiguous reshape) so input blocks are fully lane-dense.
        g = _LANE // n
        flat = _std_rows_packed(x2d.reshape(r // g, g * n), n, g)
    else:
        if n <= max_single_t:
            tile_t, xb = n, x2d
        else:
            # Very long reductions: block the T axis; zero-pad so every T block
            # is full (zeros do not change sum / sum-of-squares).
            tile_t = t_block
            t_pad = _round_up(n, tile_t)
            xb = jnp.pad(x2d, ((0, 0), (0, t_pad - n)))
        flat = _std_rows_blocked(xb, n, tile_t)

    return jnp.moveaxis(flat.reshape(lead + (1,)), -1, dim)


if __name__ == "__main__":
    key = jax.random.PRNGKey(0)
    B, C, H, T = 2, 4, 16, 16
    x = jax.random.normal(key, (B, C, H, T), dtype=jnp.float32)

    # 1) packed lane-dense path (T divides 128), trailing reduction dim.
    out = jax.block_until_ready(std_layer(x, 3))
    ref = jnp.std(x, axis=3, keepdims=True, ddof=1)
    assert out.shape == (B, C, H, 1), out.shape
    assert jnp.allclose(out, ref, atol=1e-5, rtol=1e-4), float(jnp.max(jnp.abs(out - ref)))

    # 2) general path (T does not divide 128), single T block.
    x2 = jax.random.normal(jax.random.PRNGKey(1), (B, C, H, 20), dtype=jnp.float32)
    out2 = jax.block_until_ready(std_layer(x2, 3))
    ref2 = jnp.std(x2, axis=3, keepdims=True, ddof=1)
    assert out2.shape == (B, C, H, 1), out2.shape
    assert jnp.allclose(out2, ref2, atol=1e-5, rtol=1e-4), float(jnp.max(jnp.abs(out2 - ref2)))

    # 3) non-trailing reduction dim (exercises the moveaxis wrapper).
    out3 = jax.block_until_ready(std_layer(x, 2))
    ref3 = jnp.std(x, axis=2, keepdims=True, ddof=1)
    assert out3.shape == (B, C, 1, T), out3.shape
    assert jnp.allclose(out3, ref3, atol=1e-5, rtol=1e-4), float(jnp.max(jnp.abs(out3 - ref3)))

    # 4) blocked-T accumulator path (force small T blocks to exercise it).
    x4 = jax.random.normal(jax.random.PRNGKey(2), (2, 4, 4, 2304), dtype=jnp.float32)
    out4 = jax.block_until_ready(std_layer(x4, 3, max_single_t=512, t_block=512))
    ref4 = jnp.std(x4, axis=3, keepdims=True, ddof=1)
    assert out4.shape == (2, 4, 4, 1), out4.shape
    assert jnp.allclose(out4, ref4, atol=1e-5, rtol=1e-4), float(jnp.max(jnp.abs(out4 - ref4)))

    print("KERNEL_OK")
</pallas_src>

<mosaic_0001>
module attributes {stable_mosaic.version = 11 : i64} {
  func.func @_std_packed_kernel(%arg0: i32, %arg1: memref<8x128xf32, #tpu.memory_space<vmem>>, %arg2: memref<8x8xf32, #tpu.memory_space<vmem>>) attributes {dimension_semantics = [#tpu.dimension_semantics<parallel>], iteration_bounds = array<i64: 2>, scalar_prefetch = 0 : i64, scratch_operands = 0 : i64, tpu.core_type = #tpu.core_type<tc>, window_params = [{transform_indices = @transform_0, window_bounds = array<i64: 8, 128>}, {transform_indices = @transform_1, window_bounds = array<i64: 8, 8>}]} {
    %c0 = arith.constant 0 : index
    %c0_0 = arith.constant 0 : index
    %0 = vector.load %arg1[%c0, %c0_0] : memref<8x128xf32, #tpu.memory_space<vmem>>, vector<8x128xf32>
    %1 = tpu.iota {dimensions = array<i32: 0>} : vector<128x8xi32>
    %2 = tpu.iota {dimensions = array<i32: 1>} : vector<128x8xi32>
    %c16_i32 = arith.constant 16 : i32
    %3 = vector.broadcast %c16_i32 : i32 to vector<128x8xi32>
    %4 = arith.muli %2, %3 : vector<128x8xi32>
    %5 = arith.cmpi sge, %1, %4 : vector<128x8xi32>
    %c1_i32 = arith.constant 1 : i32
    %6 = vector.broadcast %c1_i32 : i32 to vector<128x8xi32>
    %7 = arith.addi %2, %6 : vector<128x8xi32>
    %c16_i32_1 = arith.constant 16 : i32
    %8 = vector.broadcast %c16_i32_1 : i32 to vector<128x8xi32>
    %9 = arith.muli %7, %8 : vector<128x8xi32>
    %10 = arith.cmpi slt, %1, %9 : vector<128x8xi32>
    %11 = arith.andi %5, %10 : vector<128x8xi1>
    %12 = arith.extui %11 : vector<128x8xi1> to vector<128x8xi32>
    %13 = arith.sitofp %12 : vector<128x8xi32> to vector<128x8xf32>
    %14 = tpu.iota {dimensions = array<i32: 0>} : vector<8x128xi32>
    %15 = tpu.iota {dimensions = array<i32: 1>} : vector<8x128xi32>
    %c16_i32_2 = arith.constant 16 : i32
    %16 = vector.broadcast %c16_i32_2 : i32 to vector<8x128xi32>
    %17 = arith.muli %14, %16 : vector<8x128xi32>
    %18 = arith.cmpi sge, %15, %17 : vector<8x128xi32>
    %c1_i32_3 = arith.constant 1 : i32
    %19 = vector.broadcast %c1_i32_3 : i32 to vector<8x128xi32>
    %20 = arith.addi %14, %19 : vector<8x128xi32>
    %c16_i32_4 = arith.constant 16 : i32
    %21 = vector.broadcast %c16_i32_4 : i32 to vector<8x128xi32>
    %22 = arith.muli %20, %21 : vector<8x128xi32>
    %23 = arith.cmpi slt, %15, %22 : vector<8x128xi32>
    %24 = arith.andi %18, %23 : vector<8x128xi1>
    %25 = arith.extui %24 : vector<8x128xi1> to vector<8x128xi32>
    %26 = arith.sitofp %25 : vector<8x128xi32> to vector<8x128xf32>
    %cst = arith.constant dense<0.000000e+00> : vector<8x8xf32>
    %27 = tpu.matmul %0, %13, %cst {dimension_numbers = #tpu.dot_dimension_numbers<[1], [0], [0], [1], [0, 0, 1, 1], [], []>, precision = #tpu.contract_precision<fp32>} : vector<8x128xf32>, vector<128x8xf32>, vector<8x8xf32> -> vector<8x8xf32>
    %cst_5 = arith.constant 6.250000e-02 : f32
    %28 = vector.broadcast %cst_5 : f32 to vector<8x8xf32>
    %29 = arith.mulf %27, %28 : vector<8x8xf32>
    %cst_6 = arith.constant dense<0.000000e+00> : vector<8x128xf32>
    %30 = tpu.matmul %29, %26, %cst_6 {dimension_numbers = #tpu.dot_dimension_numbers<[1], [0], [0], [1], [0, 0, 1, 1], [], []>, precision = #tpu.contract_precision<fp32>} : vector<8x8xf32>, vector<8x128xf32>, vector<8x128xf32> -> vector<8x128xf32>
    %31 = arith.subf %0, %30 : vector<8x128xf32>
    %32 = arith.mulf %31, %31 : vector<8x128xf32>
    %cst_7 = arith.constant dense<0.000000e+00> : vector<8x8xf32>
    %33 = tpu.matmul %32, %13, %cst_7 {dimension_numbers = #tpu.dot_dimension_numbers<[1], [0], [0], [1], [0, 0, 1, 1], [], []>, precision = #tpu.contract_precision<fp32>} : vector<8x128xf32>, vector<128x8xf32>, vector<8x8xf32> -> vector<8x8xf32>
    %cst_8 = arith.constant 0.0666666701 : f32
    %34 = vector.broadcast %cst_8 : f32 to vector<8x8xf32>
    %35 = arith.mulf %33, %34 : vector<8x8xf32>
    %cst_9 = arith.constant 0.000000e+00 : f32
    %36 = vector.broadcast %cst_9 : f32 to vector<8x8xf32>
    %37 = arith.maximumf %35, %36 : vector<8x8xf32>
    %38 = math.sqrt %37 : vector<8x8xf32>
    %c0_10 = arith.constant 0 : index
    %c0_11 = arith.constant 0 : index
    %39 = vector.load %arg2[%c0_10, %c0_11] : memref<8x8xf32, #tpu.memory_space<vmem>>, vector<8x8xf32>
    tpu.vector_store %arg2[%c0_10, %c0_11], %38 {strides = array<i32>} : memref<8x8xf32, #tpu.memory_space<vmem>>, vector<8x8xf32>,
    return
  }
  func.func @transform_0(%arg0: i32) -> (i32, i32) {
    %c0_i32 = arith.constant 0 : i32
    %c0_i32_0 = arith.constant 0 : i32
    return %arg0, %c0_i32 : i32, i32
  }
  func.func @transform_1(%arg0: i32) -> (i32, i32) {
    %c0_i32 = arith.constant 0 : i32
    %c0_i32_0 = arith.constant 0 : i32
    return %arg0, %c0_i32 : i32, i32
  }
}

</mosaic_0001>

<llo_original>
// kernel: tpu_custom_call.1
$region0: #{tpu_custom_call.1}
  #allocation0 [shape = 'u32[]', space=smem, size = 0x4, offset = 0x4, fixed_abs, tag = 'smem constant byte address 0x4 - core index']
  #allocation1 [shape = 'u32[144,128]{1,0:T(1,128)}', space=vmem, size = 0x12000, scoped, tag = 'internal scratch']
  %s0 = inlined_call_operand.hbm [shape: f32[16,128], index: 0, kind: input, shape index: {}]
  %s1 = inlined_call_operand.vmem [shape: f32[16,8], index: 1, kind: output, shape index: {}]
  %s2 = sld [smem:[#allocation0]]
  $region41: #{tpu_custom_call.1} parent=0
    _
  %s4 = ssub.s32 1, %s2
  %s5 = scalar_select 0, %s4, %s2
  $region1: #{tpu_custom_call.1} parent=0
    #allocation2 [shape = 'u8[8192]{0}', space=vmem, size = 0x2000, scoped, tag = 'input window, operand 0']
    #allocation3 [shape = 's32[2]{0}', space=sflag, size = 0x8, scoped, tag = 'scoped memory for tpu_custom_call.1']
    %6 = vsyncpa [#allocation3], 0
    %s7 = scalar_lea.sflag [#allocation3], 1
    %8 = vsyncpa %s7, 0
    loop: start=0, step=1, limit=4
    $region2: #{tpu_custom_call.1} parent=1 // loop_pre_header
      _
    $region3: #{tpu_custom_call.1} parent=1 // loop_header
      %s10 = sphi 0, %s14
      %p11 = scmp.ge.s32.totalorder %s10, 4
      %s20 = sphi 0, %s22
      %s23 = sphi 0, %s20
      %s24 = sphi 0, %s23
      %s40 = sphi 0, %s24
      %s46 = sphi 0, %s48
      %s49 = sphi 0, %s46
      %s50 = sphi 0, %s49
      %s66 = sphi 0, %s50
    $region4: #{tpu_custom_call.1} parent=1 // loop_header_branch
      %13 = sbr.rel (%p11) target = $region8
    $region5: #{tpu_custom_call.1} parent=1 // loop_body
      %s15 = ssub.s32 %s10, 1
      %s16 = ssub.s32 %s10, 2
      %s17 = sadd.s32 %s10, 1
      %s18 = ssub.s32 %s10, %s17
      %p19 = scmp.eq.s32.totalorder %s18, 0
      %s21 = sadd.s32 %s20, 1
      %s22 = scalar_select %p19, %s20, %s21
      %p25 = pneg %p19
      %p26 = scmp.eq.s32.totalorder %s10, 1
      %p27 = por %p25, %p26
      %p28 = scmp.ne.s32.totalorder %s20, %s23
      %p29 = scmp.eq.s32.totalorder %s10, 0
      %p30 = por %p28, %p29
      %p31 = scmp.ne.s32.totalorder %s20, %s23
      %p32 = scmp.eq.s32.totalorder %s15, 1
      %p33 = por %p31, %p32
      %p34 = scmp.ne.s32.totalorder %s23, %s24
      %p35 = scmp.eq.s32.totalorder %s15, 0
      %p36 = por %p34, %p35
      %p37 = scmp.ne.s32.totalorder %s23, %s24
      %p38 = scmp.eq.s32.totalorder %s16, 1
      %p39 = por %p37, %p38
      %p41 = scmp.ne.s32.totalorder %s24, %s40
      %p42 = scmp.eq.s32.totalorder %s16, 0
      %p43 = por %p41, %p42
      %s44 = ssub.s32 %s10, %s17
      %p45 = scmp.eq.s32.totalorder %s44, 0
      %s47 = sadd.s32 %s46, 1
      %s48 = scalar_select %p45, %s46, %s47
      %p51 = pneg %p45
      %p52 = scmp.eq.s32.totalorder %s10, 1
      %p53 = por %p51, %p52
      %p54 = scmp.ne.s32.totalorder %s46, %s49
      %p55 = scmp.eq.s32.totalorder %s10, 0
      %p56 = por %p54, %p55
      %p57 = scmp.ne.s32.totalorder %s46, %s49
      %p58 = scmp.eq.s32.totalorder %s15, 1
      %p59 = por %p57, %p58
      %p60 = scmp.ne.s32.totalorder %s49, %s50
      %p61 = scmp.eq.s32.totalorder %s15, 0
      %p62 = por %p60, %p61
      %p63 = scmp.ne.s32.totalorder %s49, %s50
      %p64 = scmp.eq.s32.totalorder %s16, 1
      %p65 = por %p63, %p64
      %p67 = scmp.ne.s32.totalorder %s50, %s66
      %p68 = scmp.eq.s32.totalorder %s16, 0
      %p69 = por %p67, %p68
      %p70 = scmp.le.s32.totalorder 1, %s10
      %p71 = scmp.lt.s32.totalorder %s10, 3
      %p72 = pnand %p70, %p71
      %p73 = pneg %p72
      // Predicated region
      $region9: #{tpu_custom_call.1} parent=5 // pred_check
        _
      $region10: #{tpu_custom_call.1} parent=5 // pred_check_branch
        %75 = sbr.rel (%p72) target = $region12
      $region11: #{tpu_custom_call.1} parent=5 // pred_region
        %s76 = ssub.s32 %s10, 1
      $region12: #{tpu_custom_call.1} parent=5 // pred_fallthru
        _
      %p77 = scmp.lt.s32.totalorder %s10, 2
      // Predicated region
      $region13: #{tpu_custom_call.1} parent=5 // pred_check
        %p78 = pneg %p77
      $region14: #{tpu_custom_call.1} parent=5 // pred_check_branch
        %80 = sbr.rel (%p78) target = $region16
      $region15: #{tpu_custom_call.1} parent=5 // pred_region
        // Predicated region
        $region17: #{tpu_custom_call.1} parent=15 // pred_check
          %p81 = pneg %p30
        $region18: #{tpu_custom_call.1} parent=15 // pred_check_branch
          %83 = sbr.rel (%p81) target = $region20
        $region19: #{tpu_custom_call.1} parent=15 // pred_region
          %s84 = sand.u32 %s20, 1
          %s85 = scalar_lea.sflag [#allocation3], %s84
          %s86 = sand.u32 %s20, 1
          %s87 = smul.addr %s86, 8
          %s88 = scalar_lea.vmem [#allocation2], %s87
          %s90 = ssub.s32 128, 128
          %91 = vsyncadd %s85, %s90
          %s92 = smul.addr %s10, 128
          %s93 = scalar_lea.hbm %s0, %s92
          %s95 = sshll.u32 %s88, 4
          %s96 = int_to_ptr.vmem [resolvable:$true] %s95
          %98 = dma.hbm_to_vmem [thread:$0]  %s93, 128, %s96, %s85
        $region20: #{tpu_custom_call.1} parent=15 // pred_fallthru
          _
      $region16: #{tpu_custom_call.1} parent=5 // pred_fallthru
        _
      %p99 = scmp.le.s32.totalorder 1, %s10
      %p100 = scmp.lt.s32.totalorder %s10, 3
      %p101 = pnand %p99, %p100
      %p102 = pneg %p101
      // Predicated region
      $region21: #{tpu_custom_call.1} parent=5 // pred_check
        _
      $region22: #{tpu_custom_call.1} parent=5 // pred_check_branch
        %104 = sbr.rel (%p101) target = $region24
      $region23: #{tpu_custom_call.1} parent=5 // pred_region
        %s105 = ssub.s32 %s10, 1
        %s106 = sand.u32 %s23, 1
        %s107 = scalar_lea.sflag [#allocation3], %s106
        %s108 = sand.u32 %s23, 1
        %s109 = smul.addr %s108, 8
        %s110 = scalar_lea.vmem [#allocation2], %s109
        // Predicated region
        $region25: #{tpu_custom_call.1} parent=23 // pred_check
          %p111 = pneg %p36
        $region26: #{tpu_custom_call.1} parent=23 // pred_check_branch
          %113 = sbr.rel (%p111) target = $region28
        $region27: #{tpu_custom_call.1} parent=23 // pred_region
          %114 = dma.done %s107, 128
        $region28: #{tpu_custom_call.1} parent=23 // pred_fallthru
          _
        %s115 = sand.u32 %s23, 1
        %s116 = scalar_lea.sflag [#allocation3], %s115
        %s117 = sand.u32 %s23, 1
        %s118 = smul.addr %s117, 8
        %s119 = scalar_lea.vmem [#allocation2], %s118
        %p120 = pneg %p36
        %p121 = pneg %p33
        %p122 = pneg %p62
        %p123 = pneg %p59
        %p124 = scmp.lt.s32.totalorder %s15, 1
        %s125 = scalar_select %p124, %s15, 1
        %s126 = smul.addr %s125, 8
        %s127 = scalar_lea.vmem %s1, %s126
        %p128 = scmp.lt.s32.totalorder %s15, 1
        %s129 = scalar_select %p128, %s15, 1
        %s130 = smul.addr %s129, 8
        %s131 = scalar_lea.vmem %s1, %s130
        %v132 = vld [vmem:[%s110] sm:$0xff]
        %v133 = vlaneseq
        %v134 = vshrl.u32 %v133, 7
        %v135 = vadd.s32 %v134, 8
        %v136 = vadd.s32 %v134, 16
        %v137 = vadd.s32 %v134, 24
        %v138 = vadd.s32 %v134, 32
        %v139 = vadd.s32 %v134, 40
        %v140 = vadd.s32 %v134, 48
        %v141 = vadd.s32 %v134, 56
        %v142 = vadd.s32 %v134, 64
        %v143 = vadd.s32 %v134, 72
        %v144 = vadd.s32 %v134, 80
        %v145 = vadd.s32 %v134, 88
        %v146 = vadd.s32 %v134, 96
        %v147 = vadd.s32 %v134, 104
        %v148 = vadd.s32 %v134, 112
        %v149 = vadd.s32 %v134, 120
        %v150 = vlaneseq
        %v151 = vand.u32 %v150, 127
        %v152 = vmul.u32 %v151, 16
        %vm153 = vcmp.ge.s32.totalorder %v134, %v152
        %vm154 = vcmp.ge.s32.totalorder %v135, %v152
        %vm155 = vcmp.ge.s32.totalorder %v136, %v152
        %vm156 = vcmp.ge.s32.totalorder %v137, %v152
        %vm157 = vcmp.ge.s32.totalorder %v138, %v152
        %vm158 = vcmp.ge.s32.totalorder %v139, %v152
        %vm159 = vcmp.ge.s32.totalorder %v140, %v152
        %vm160 = vcmp.ge.s32.totalorder %v141, %v152
        %vm161 = vcmp.ge.s32.totalorder %v142, %v152
        %vm162 = vcmp.ge.s32.totalorder %v143, %v152
        %vm163 = vcmp.ge.s32.totalorder %v144, %v152
        %vm164 = vcmp.ge.s32.totalorder %v145, %v152
        %vm165 = vcmp.ge.s32.totalorder %v146, %v152
        %vm166 = vcmp.ge.s32.totalorder %v147, %v152
        %vm167 = vcmp.ge.s32.totalorder %v148, %v152
        %vm168 = vcmp.ge.s32.totalorder %v149, %v152
        %v169 = vadd.s32 %v151, 1
        %v170 = vmul.u32 %v169, 16
        %vm171 = vcmp.lt.s32.totalorder %v134, %v170
        %vm172 = vcmp.lt.s32.totalorder %v135, %v170
        %vm173 = vcmp.lt.s32.totalorder %v136, %v170
        %vm174 = vcmp.lt.s32.totalorder %v137, %v170
        %vm175 = vcmp.lt.s32.totalorder %v138, %v170
        %vm176 = vcmp.lt.s32.totalorder %v139, %v170
        %vm177 = vcmp.lt.s32.totalorder %v140, %v170
        %vm178 = vcmp.lt.s32.totalorder %v141, %v170
        %vm179 = vcmp.lt.s32.totalorder %v142, %v170
        %vm180 = vcmp.lt.s32.totalorder %v143, %v170
        %vm181 = vcmp.lt.s32.totalorder %v144, %v170
        %vm182 = vcmp.lt.s32.totalorder %v145, %v170
        %vm183 = vcmp.lt.s32.totalorder %v146, %v170
        %vm184 = vcmp.lt.s32.totalorder %v147, %v170
        %vm185 = vcmp.lt.s32.totalorder %v148, %v170
        %vm186 = vcmp.lt.s32.totalorder %v149, %v170
        %vm187 = vmand %vm153, %vm171
        %vm188 = vmand %vm154, %vm172
        %vm189 = vmand %vm155, %vm173
        %vm190 = vmand %vm156, %vm174
        %vm191 = vmand %vm157, %vm175
        %vm192 = vmand %vm158, %vm176
        %vm193 = vmand %vm159, %vm177
        %vm194 = vmand %vm160, %vm178
        %vm195 = vmand %vm161, %vm179
        %vm196 = vmand %vm162, %vm180
        %vm197 = vmand %vm163, %vm181
        %vm198 = vmand %vm164, %vm182
        %vm199 = vmand %vm165, %vm183
        %vm200 = vmand %vm166, %vm184
        %vm201 = vmand %vm167, %vm185
        %vm202 = vmand %vm168, %vm186
        %v203 = vsel %vm187, 1, 0
        %v204 = vsel %vm188, 1, 0
        %v205 = vsel %vm189, 1, 0
        %v206 = vsel %vm190, 1, 0
        %v207 = vsel %vm191, 1, 0
        %v208 = vsel %vm192, 1, 0
        %v209 = vsel %vm193, 1, 0
        %v210 = vsel %vm194, 1, 0
        %v211 = vsel %vm195, 1, 0
        %v212 = vsel %vm196, 1, 0
        %v213 = vsel %vm197, 1, 0
        %v214 = vsel %vm198, 1, 0
        %v215 = vsel %vm199, 1, 0
        %v216 = vsel %vm200, 1, 0
        %v217 = vsel %vm201, 1, 0
        %v218 = vsel %vm202, 1, 0
        %v219 = vcvt.s32.f32 %v203
        %v220 = vcvt.s32.f32 %v204
        %v221 = vcvt.s32.f32 %v205
        %v222 = vcvt.s32.f32 %v206
        %v223 = vcvt.s32.f32 %v207
        %v224 = vcvt.s32.f32 %v208
        %v225 = vcvt.s32.f32 %v209
        %v226 = vcvt.s32.f32 %v210
        %v227 = vcvt.s32.f32 %v211
        %v228 = vcvt.s32.f32 %v212
        %v229 = vcvt.s32.f32 %v213
        %v230 = vcvt.s32.f32 %v214
        %v231 = vcvt.s32.f32 %v215
        %v232 = vcvt.s32.f32 %v216
        %v233 = vcvt.s32.f32 %v217
        %v234 = vcvt.s32.f32 %v218
        %v235 = vmul.u32 %v134, 16
        %vm236 = vcmp.ge.s32.totalorder %v151, %v235
        %v237 = vadd.s32 %v134, 1
        %v238 = vmul.u32 %v237, 16
        %vm239 = vcmp.lt.s32.totalorder %v151, %v238
        %vm240 = vmand %vm236, %vm239
        %v241 = vsel %vm240, 1, 0
        %v242 = vcvt.s32.f32 %v241
        %243 = vmatprep.subr.mxu0 0.0
        %v244 = vand.u32 %v219, 4294901760
        %245 = vmatpush1.msra.mxu0 %v244
        %246 = vmatprep.subr.mxu0 0.0
        %v247 = vand.u32 %v220, 4294901760
        %248 = vmatpush1.msra.mxu0 %v247
        %249 = vmatprep.subr.mxu0 0.0
        %v250 = vand.u32 %v221, 4294901760
        %251 = vmatpush1.msra.mxu0 %v250
        %252 = vmatprep.subr.mxu0 0.0
        %v253 = vand.u32 %v222, 4294901760
        %254 = vmatpush1.msra.mxu0 %v253
        %255 = vmatprep.subr.mxu0 0.0
        %v256 = vand.u32 %v223, 4294901760
        %257 = vmatpush1.msra.mxu0 %v256
        %258 = vmatprep.subr.mxu0 0.0
        %v259 = vand.u32 %v224, 4294901760
        %260 = vmatpush1.msra.mxu0 %v259
        %261 = vmatprep.subr.mxu0 0.0
        %v262 = vand.u32 %v225, 4294901760
        %263 = vmatpush1.msra.mxu0 %v262
        %264 = vmatprep.subr.mxu0 0.0
        %v265 = vand.u32 %v226, 4294901760
        %266 = vmatpush1.msra.mxu0 %v265
        %267 = vmatprep.subr.mxu0 0.0
        %v268 = vand.u32 %v227, 4294901760
        %269 = vmatpush1.msra.mxu0 %v268
        %270 = vmatprep.subr.mxu0 0.0
        %v271 = vand.u32 %v228, 4294901760
        %272 = vmatpush1.msra.mxu0 %v271
        %273 = vmatprep.subr.mxu0 0.0
        %v274 = vand.u32 %v229, 4294901760
        %275 = vmatpush1.msra.mxu0 %v274
        %276 = vmatprep.subr.mxu0 0.0
        %v277 = vand.u32 %v230, 4294901760
        %278 = vmatpush1.msra.mxu0 %v277
        %279 = vmatprep.subr.mxu0 0.0
        %v280 = vand.u32 %v231, 4294901760
        %281 = vmatpush1.msra.mxu0 %v280
        %282 = vmatprep.subr.mxu0 0.0
        %v283 = vand.u32 %v232, 4294901760
        %284 = vmatpush1.msra.mxu0 %v283
        %285 = vmatprep.subr.mxu0 0.0
        %v286 = vand.u32 %v233, 4294901760
        %287 = vmatpush1.msra.mxu0 %v286
        %288 = vmatprep.subr.mxu0 0.0
        %v289 = vand.u32 %v234, 4294901760
        %290 = vmatpush1.msra.mxu0 %v289
        %291 = vmatprep.subr.mxu0 0.0
        %292 = vmatpush1.msra.mxu0 0.0
        %293 = vmatprep.subr.mxu0 0.0
        %294 = vmatpush1.msra.mxu0 0.0
        %295 = vmatprep.subr.mxu0 0.0
        %296 = vmatpush1.msra.mxu0 0.0
        %297 = vmatprep.subr.mxu0 0.0
        %298 = vmatpush1.msra.mxu0 0.0
        %299 = vmatprep.subr.mxu0 0.0
        %300 = vmatpush1.msra.mxu0 0.0
        %301 = vmatprep.subr.mxu0 0.0
        %302 = vmatpush1.msra.mxu0 0.0
        %303 = vmatprep.subr.mxu0 0.0
        %304 = vmatpush1.msra.mxu0 0.0
        %305 = vmatprep.subr.mxu0 0.0
        %306 = vmatpush1.msra.mxu0 0.0
        %307 = vmatprep.subr.mxu0 0.0
        %308 = vmatpush1.msra.mxu0 0.0
        %309 = vmatprep.subr.mxu0 0.0
        %310 = vmatpush1.msra.mxu0 0.0
        %311 = vmatprep.subr.mxu0 0.0
        %312 = vmatpush1.msra.mxu0 0.0
        %313 = vmatprep.subr.mxu0 0.0
        %314 = vmatpush1.msra.mxu0 0.0
        %315 = vmatprep.subr.mxu0 0.0
        %316 = vmatpush1.msra.mxu0 0.0
        %317 = vmatprep.subr.mxu0 0.0
        %318 = vmatpush1.msra.mxu0 0.0
        %319 = vmatprep.subr.mxu0 0.0
        %320 = vmatpush1.msra.mxu0 0.0
        %321 = vmatprep.subr.mxu0 0.0
        %322 = vmatpush1.msra.mxu0 0.0
        %323 = vmatprep.mubr.f32.mxu0 0.0
        %v324 = vand.u32 %v132, 4294901760
        %v325 = vsub.f32 %v132, %v324
        %v326 = vand.u32 %v325, 4294901760
        %v327 = vsub.f32 %v325, %v326
        %v328 = vand.u32 %v327, 4294901760
        %329 = vmatmul.mubr.f32.gmra.mrb[0].mxu0 %v328
        %v330 = vpop.f32.mrb[0].mxu0
        %v331 = vadd.f32 0.0, %v330
        %v332 = vpop.f32.mrb[0].mxu0
        %333 = vdwg.mxu0
        %334 = vmatprep.subr.mxu0 0.0
        %v335 = vand.u32 %v219, 4294901760
        %v336 = vsub.f32 %v219, %v335
        %v337 = vand.u32 %v336, 4294901760
        %v338 = vsub.f32 %v336, %v337
        %v339 = vand.u32 %v338, 4294901760
        %340 = vmatpush1.msra.mxu0 %v339
        %341 = vmatprep.subr.mxu0 0.0
        %v342 = vand.u32 %v220, 4294901760
        %v343 = vsub.f32 %v220, %v342
        %v344 = vand.u32 %v343, 4294901760
        %v345 = vsub.f32 %v343, %v344
        %v346 = vand.u32 %v345, 4294901760
        %347 = vmatpush1.msra.mxu0 %v346
        %348 = vmatprep.subr.mxu0 0.0
        %v349 = vand.u32 %v221, 4294901760
        %v350 = vsub.f32 %v221, %v349
        %v351 = vand.u32 %v350, 4294901760
        %v352 = vsub.f32 %v350, %v351
        %v353 = vand.u32 %v352, 4294901760
        %354 = vmatpush1.msra.mxu0 %v353
        %355 = vmatprep.subr.mxu0 0.0
        %v356 = vand.u32 %v222, 4294901760
        %v357 = vsub.f32 %v222, %v356
        %v358 = vand.u32 %v357, 4294901760
        %v359 = vsub.f32 %v357, %v358
        %v360 = vand.u32 %v359, 4294901760
        %361 = vmatpush1.msra.mxu0 %v360
        %362 = vmatprep.subr.mxu0 0.0
        %v363 = vand.u32 %v223, 4294901760
        %v364 = vsub.f32 %v223, %v363
        %v365 = vand.u32 %v364, 4294901760
        %v366 = vsub.f32 %v364, %v365
        %v367 = vand.u32 %v366, 4294901760
        %368 = vmatpush1.msra.mxu0 %v367
        %369 = vmatprep.subr.mxu0 0.0
        %v370 = vand.u32 %v224, 4294901760
        %v371 = vsub.f32 %v224, %v370
        %v372 = vand.u32 %v371, 4294901760
        %v373 = vsub.f32 %v371, %v372
        %v374 = vand.u32 %v373, 4294901760
        %375 = vmatpush1.msra.mxu0 %v374
        %376 = vmatprep.subr.mxu0 0.0
        %v377 = vand.u32 %v225, 4294901760
        %v378 = vsub.f32 %v225, %v377
        %v379 = vand.u32 %v378, 4294901760
        %v380 = vsub.f32 %v378, %v379
        %v381 = vand.u32 %v380, 4294901760
        %382 = vmatpush1.msra.mxu0 %v381
        %383 = vmatprep.subr.mxu0 0.0
        %v384 = vand.u32 %v226, 4294901760
        %v385 = vsub.f32 %v226, %v384
        %v386 = vand.u32 %v385, 4294901760
        %v387 = vsub.f32 %v385, %v386
        %v388 = vand.u32 %v387, 4294901760
        %389 = vmatpush1.msra.mxu0 %v388
        %390 = vmatprep.subr.mxu0 0.0
        %v391 = vand.u32 %v227, 4294901760
        %v392 = vsub.f32 %v227, %v391
        %v393 = vand.u32 %v392, 4294901760
        %v394 = vsub.f32 %v392, %v393
        %v395 = vand.u32 %v394, 4294901760
        %396 = vmatpush1.msra.mxu0 %v395
        %397 = vmatprep.subr.mxu0 0.0
        %v398 = vand.u32 %v228, 4294901760
        %v399 = vsub.f32 %v228, %v398
        %v400 = vand.u32 %v399, 4294901760
        %v401 = vsub.f32 %v399, %v400
        %v402 = vand.u32 %v401, 4294901760
        %403 = vmatpush1.msra.mxu0 %v402
        %404 = vmatprep.subr.mxu0 0.0
        %v405 = vand.u32 %v229, 4294901760
        %v406 = vsub.f32 %v229, %v405
        %v407 = vand.u32 %v406, 4294901760
        %v408 = vsub.f32 %v406, %v407
        %v409 = vand.u32 %v408, 4294901760
        %410 = vmatpush1.msra.mxu0 %v409
        %411 = vmatprep.subr.mxu0 0.0
        %v412 = vand.u32 %v230, 4294901760
        %v413 = vsub.f32 %v230, %v412
        %v414 = vand.u32 %v413, 4294901760
        %v415 = vsub.f32 %v413, %v414
        %v416 = vand.u32 %v415, 4294901760
        %417 = vmatpush1.msra.mxu0 %v416
        %418 = vmatprep.subr.mxu0 0.0
        %v419 = vand.u32 %v231, 4294901760
        %v420 = vsub.f32 %v231, %v419
        %v421 = vand.u32 %v420, 4294901760
        %v422 = vsub.f32 %v420, %v421
        %v423 = vand.u32 %v422, 4294901760
        %424 = vmatpush1.msra.mxu0 %v423
        %425 = vmatprep.subr.mxu0 0.0
        %v426 = vand.u32 %v232, 4294901760
        %v427 = vsub.f32 %v232, %v426
        %v428 = vand.u32 %v427, 4294901760
        %v429 = vsub.f32 %v427, %v428
        %v430 = vand.u32 %v429, 4294901760
        %431 = vmatpush1.msra.mxu0 %v430
        %432 = vmatprep.subr.mxu0 0.0
        %v433 = vand.u32 %v233, 4294901760
        %v434 = vsub.f32 %v233, %v433
        %v435 = vand.u32 %v434, 4294901760
        %v436 = vsub.f32 %v434, %v435
        %v437 = vand.u32 %v436, 4294901760
        %438 = vmatpush1.msra.mxu0 %v437
        %439 = vmatprep.subr.mxu0 0.0
        %v440 = vand.u32 %v234, 4294901760
        %v441 = vsub.f32 %v234, %v440
        %v442 = vand.u32 %v441, 4294901760
        %v443 = vsub.f32 %v441, %v442
        %v444 = vand.u32 %v443, 4294901760
        %445 = vmatpush1.msra.mxu0 %v444
        %446 = vmatprep.subr.mxu0 0.0
        %447 = vmatpush1.msra.mxu0 0.0
        %448 = vmatprep.subr.mxu0 0.0
        %449 = vmatpush1.msra.mxu0 0.0
        %450 = vmatprep.subr.mxu0 0.0
        %451 = vmatpush1.msra.mxu0 0.0
        %452 = vmatprep.subr.mxu0 0.0
        %453 = vmatpush1.msra.mxu0 0.0
        %454 = vmatprep.subr.mxu0 0.0
        %455 = vmatpush1.msra.mxu0 0.0
        %456 = vmatprep.subr.mxu0 0.0
        %457 = vmatpush1.msra.mxu0 0.0
        %458 = vmatprep.subr.mxu0 0.0
        %459 = vmatpush1.msra.mxu0 0.0
        %460 = vmatprep.subr.mxu0 0.0
        %461 = vmatpush1.msra.mxu0 0.0
        %462 = vmatprep.subr.mxu0 0.0
        %463 = vmatpush1.msra.mxu0 0.0
        %464 = vmatprep.subr.mxu0 0.0
        %465 = vmatpush1.msra.mxu0 0.0
        %466 = vmatprep.subr.mxu0 0.0
        %467 = vmatpush1.msra.mxu0 0.0
        %468 = vmatprep.subr.mxu0 0.0
        %469 = vmatpush1.msra.mxu0 0.0
        %470 = vmatprep.subr.mxu0 0.0
        %471 = vmatpush1.msra.mxu0 0.0
        %472 = vmatprep.subr.mxu0 0.0
        %473 = vmatpush1.msra.mxu0 0.0
        %474 = vmatprep.subr.mxu0 0.0
        %475 = vmatpush1.msra.mxu0 0.0
        %476 = vmatprep.subr.mxu0 0.0
        %477 = vmatpush1.msra.mxu0 0.0
        %478 = vmatprep.mubr.f32.mxu0 0.0
        %v479 = vand.u32 %v132, 4294901760
        %480 = vmatmul.mubr.f32.gmra.mrb[0].mxu0 %v479
        %v481 = vpop.f32.mrb[0].mxu0
        %v482 = vadd.f32 %v331, %v481
        %v483 = vpop.f32.mrb[0].mxu0
        %484 = vdwg.mxu0
        %485 = vmatprep.subr.mxu0 0.0
        %v486 = vand.u32 %v219, 4294901760
        %v487 = vsub.f32 %v219, %v486
        %488 = vmatpush1.msra.mxu0 %v487
        %489 = vmatprep.subr.mxu0 0.0
        %v490 = vand.u32 %v220, 4294901760
        %v491 = vsub.f32 %v220, %v490
        %492 = vmatpush1.msra.mxu0 %v491
        %493 = vmatprep.subr.mxu0 0.0
        %v494 = vand.u32 %v221, 4294901760
        %v495 = vsub.f32 %v221, %v494
        %496 = vmatpush1.msra.mxu0 %v495
        %497 = vmatprep.subr.mxu0 0.0
        %v498 = vand.u32 %v222, 4294901760
        %v499 = vsub.f32 %v222, %v498
        %500 = vmatpush1.msra.mxu0 %v499
        %501 = vmatprep.subr.mxu0 0.0
        %v502 = vand.u32 %v223, 4294901760
        %v503 = vsub.f32 %v223, %v502
        %504 = vmatpush1.msra.mxu0 %v503
        %505 = vmatprep.subr.mxu0 0.0
        %v506 = vand.u32 %v224, 4294901760
        %v507 = vsub.f32 %v224, %v506
        %508 = vmatpush1.msra.mxu0 %v507
        %509 = vmatprep.subr.mxu0 0.0
        %v510 = vand.u32 %v225, 4294901760
        %v511 = vsub.f32 %v225, %v510
        %512 = vmatpush1.msra.mxu0 %v511
        %513 = vmatprep.subr.mxu0 0.0
        %v514 = vand.u32 %v226, 4294901760
        %v515 = vsub.f32 %v226, %v514
        %516 = vmatpush1.msra.mxu0 %v515
        %517 = vmatprep.subr.mxu0 0.0
        %v518 = vand.u32 %v227, 4294901760
        %v519 = vsub.f32 %v227, %v518
        %520 = vmatpush1.msra.mxu0 %v519
        %521 = vmatprep.subr.mxu0 0.0
        %v522 = vand.u32 %v228, 4294901760
        %v523 = vsub.f32 %v228, %v522
        %524 = vmatpush1.msra.mxu0 %v523
        %525 = vmatprep.subr.mxu0 0.0
        %v526 = vand.u32 %v229, 4294901760
        %v527 = vsub.f32 %v229, %v526
        %528 = vmatpush1.msra.mxu0 %v527
        %529 = vmatprep.subr.mxu0 0.0
        %v530 = vand.u32 %v230, 4294901760
        %v531 = vsub.f32 %v230, %v530
        %532 = vmatpush1.msra.mxu0 %v531
        %533 = vmatprep.subr.mxu0 0.0
        %v534 = vand.u32 %v231, 4294901760
        %v535 = vsub.f32 %v231, %v534
        %536 = vmatpush1.msra.mxu0 %v535
        %537 = vmatprep.subr.mxu0 0.0
        %v538 = vand.u32 %v232, 4294901760
        %v539 = vsub.f32 %v232, %v538
        %540 = vmatpush1.msra.mxu0 %v539
        %541 = vmatprep.subr.mxu0 0.0
        %v542 = vand.u32 %v233, 4294901760
        %v543 = vsub.f32 %v233, %v542
        %544 = vmatpush1.msra.mxu0 %v543
        %545 = vmatprep.subr.mxu0 0.0
        %v546 = vand.u32 %v234, 4294901760
        %v547 = vsub.f32 %v234, %v546
        %548 = vmatpush1.msra.mxu0 %v547
        %549 = vmatprep.subr.mxu0 0.0
        %550 = vmatpush1.msra.mxu0 0.0
        %551 = vmatprep.subr.mxu0 0.0
        %552 = vmatpush1.msra.mxu0 0.0
        %553 = vmatprep.subr.mxu0 0.0
        %554 = vmatpush1.msra.mxu0 0.0
        %555 = vmatprep.subr.mxu0 0.0
        %556 = vmatpush1.msra.mxu0 0.0
        %557 = vmatprep.subr.mxu0 0.0
        %558 = vmatpush1.msra.mxu0 0.0
        %559 = vmatprep.subr.mxu0 0.0
        %560 = vmatpush1.msra.mxu0 0.0
        %561 = vmatprep.subr.mxu0 0.0
        %562 = vmatpush1.msra.mxu0 0.0
        %563 = vmatprep.subr.mxu0 0.0
        %564 = vmatpush1.msra.mxu0 0.0
        %565 = vmatprep.subr.mxu0 0.0
        %566 = vmatpush1.msra.mxu0 0.0
        %567 = vmatprep.subr.mxu0 0.0
        %568 = vmatpush1.msra.mxu0 0.0
        %569 = vmatprep.subr.mxu0 0.0
        %570 = vmatpush1.msra.mxu0 0.0
        %571 = vmatprep.subr.mxu0 0.0
        %572 = vmatpush1.msra.mxu0 0.0
        %573 = vmatprep.subr.mxu0 0.0
        %574 = vmatpush1.msra.mxu0 0.0
        %575 = vmatprep.subr.mxu0 0.0
        %576 = vmatpush1.msra.mxu0 0.0
        %577 = vmatprep.subr.mxu0 0.0
        %578 = vmatpush1.msra.mxu0 0.0
        %579 = vmatprep.subr.mxu0 0.0
        %580 = vmatpush1.msra.mxu0 0.0
        %581 = vmatprep.mubr.f32.mxu0 0.0
        %v582 = vand.u32 %v132, 4294901760
        %v583 = vsub.f32 %v132, %v582
        %584 = vmatmul.mubr.f32.gmra.mrb[0].mxu0 %v583
        %v585 = vpop.f32.mrb[0].mxu0
        %v586 = vadd.f32 %v482, %v585
        %v587 = vpop.f32.mrb[0].mxu0
        %588 = vdwg.mxu0
        %589 = vmatprep.subr.mxu0 0.0
        %v590 = vand.u32 %v219, 4294901760
        %591 = vmatpush1.msra.mxu0 %v590
        %592 = vmatprep.subr.mxu0 0.0
        %v593 = vand.u32 %v220, 4294901760
        %594 = vmatpush1.msra.mxu0 %v593
        %595 = vmatprep.subr.mxu0 0.0
        %v596 = vand.u32 %v221, 4294901760
        %597 = vmatpush1.msra.mxu0 %v596
        %598 = vmatprep.subr.mxu0 0.0
        %v599 = vand.u32 %v222, 4294901760
        %600 = vmatpush1.msra.mxu0 %v599
        %601 = vmatprep.subr.mxu0 0.0
        %v602 = vand.u32 %v223, 4294901760
        %603 = vmatpush1.msra.mxu0 %v602
        %604 = vmatprep.subr.mxu0 0.0
        %v605 = vand.u32 %v224, 4294901760
        %606 = vmatpush1.msra.mxu0 %v605
        %607 = vmatprep.subr.mxu0 0.0
        %v608 = vand.u32 %v225, 4294901760
        %609 = vmatpush1.msra.mxu0 %v608
        %610 = vmatprep.subr.mxu0 0.0
        %v611 = vand.u32 %v226, 4294901760
        %612 = vmatpush1.msra.mxu0 %v611
        %613 = vmatprep.subr.mxu0 0.0
        %v614 = vand.u32 %v227, 4294901760
        %615 = vmatpush1.msra.mxu0 %v614
        %616 = vmatprep.subr.mxu0 0.0
        %v617 = vand.u32 %v228, 4294901760
        %618 = vmatpush1.msra.mxu0 %v617
        %619 = vmatprep.subr.mxu0 0.0
        %v620 = vand.u32 %v229, 4294901760
        %621 = vmatpush1.msra.mxu0 %v620
        %622 = vmatprep.subr.mxu0 0.0
        %v623 = vand.u32 %v230, 4294901760
        %624 = vmatpush1.msra.mxu0 %v623
        %625 = vmatprep.subr.mxu0 0.0
        %v626 = vand.u32 %v231, 4294901760
        %627 = vmatpush1.msra.mxu0 %v626
        %628 = vmatprep.subr.mxu0 0.0
        %v629 = vand.u32 %v232, 4294901760
        %630 = vmatpush1.msra.mxu0 %v629
        %631 = vmatprep.subr.mxu0 0.0
        %v632 = vand.u32 %v233, 4294901760
        %633 = vmatpush1.msra.mxu0 %v632
        %634 = vmatprep.subr.mxu0 0.0
        %v635 = vand.u32 %v234, 4294901760
        %636 = vmatpush1.msra.mxu0 %v635
        %637 = vmatprep.subr.mxu0 0.0
        %638 = vmatpush1.msra.mxu0 0.0
        %639 = vmatprep.subr.mxu0 0.0
        %640 = vmatpush1.msra.mxu0 0.0
        %641 = vmatprep.subr.mxu0 0.0
        %642 = vmatpush1.msra.mxu0 0.0
        %643 = vmatprep.subr.mxu0 0.0
        %644 = vmatpush1.msra.mxu0 0.0
        %645 = vmatprep.subr.mxu0 0.0
        %646 = vmatpush1.msra.mxu0 0.0
        %647 = vmatprep.subr.mxu0 0.0
        %648 = vmatpush1.msra.mxu0 0.0
        %649 = vmatprep.subr.mxu0 0.0
        %650 = vmatpush1.msra.mxu0 0.0
        %651 = vmatprep.subr.mxu0 0.0
        %652 = vmatpush1.msra.mxu0 0.0
        %653 = vmatprep.subr.mxu0 0.0
        %654 = vmatpush1.msra.mxu0 0.0
        %655 = vmatprep.subr.mxu0 0.0
        %656 = vmatpush1.msra.mxu0 0.0
        %657 = vmatprep.subr.mxu0 0.0
        %658 = vmatpush1.msra.mxu0 0.0
        %659 = vmatprep.subr.mxu0 0.0
        %660 = vmatpush1.msra.mxu0 0.0
        %661 = vmatprep.subr.mxu0 0.0
        %662 = vmatpush1.msra.mxu0 0.0
        %663 = vmatprep.subr.mxu0 0.0
        %664 = vmatpush1.msra.mxu0 0.0
        %665 = vmatprep.subr.mxu0 0.0
        %666 = vmatpush1.msra.mxu0 0.0
        %667 = vmatprep.subr.mxu0 0.0
        %668 = vmatpush1.msra.mxu0 0.0
        %669 = vmatprep.mubr.f32.mxu0 0.0
        %v670 = vand.u32 %v132, 4294901760
        %v671 = vsub.f32 %v132, %v670
        %v672 = vand.u32 %v671, 4294901760
        %673 = vmatmul.mubr.f32.gmra.mrb[0].mxu0 %v672
        %v674 = vpop.f32.mrb[0].mxu0
        %v675 = vadd.f32 %v586, %v674
        %v676 = vpop.f32.mrb[0].mxu0
        %677 = vdwg.mxu0
        %678 = vmatprep.subr.mxu0 0.0
        %v679 = vand.u32 %v219, 4294901760
        %v680 = vsub.f32 %v219, %v679
        %v681 = vand.u32 %v680, 4294901760
        %682 = vmatpush1.msra.mxu0 %v681
        %683 = vmatprep.subr.mxu0 0.0
        %v684 = vand.u32 %v220, 4294901760
        %v685 = vsub.f32 %v220, %v684
        %v686 = vand.u32 %v685, 4294901760
        %687 = vmatpush1.msra.mxu0 %v686
        %688 = vmatprep.subr.mxu0 0.0
        %v689 = vand.u32 %v221, 4294901760
        %v690 = vsub.f32 %v221, %v689
        %v691 = vand.u32 %v690, 4294901760
        %692 = vmatpush1.msra.mxu0 %v691
        %693 = vmatprep.subr.mxu0 0.0
        %v694 = vand.u32 %v222, 4294901760
        %v695 = vsub.f32 %v222, %v694
        %v696 = vand.u32 %v695, 4294901760
        %697 = vmatpush1.msra.mxu0 %v696
        %698 = vmatprep.subr.mxu0 0.0
        %v699 = vand.u32 %v223, 4294901760
        %v700 = vsub.f32 %v223, %v699
        %v701 = vand.u32 %v700, 4294901760
        %702 = vmatpush1.msra.mxu0 %v701
        %703 = vmatprep.subr.mxu0 0.0
        %v704 = vand.u32 %v224, 4294901760
        %v705 = vsub.f32 %v224, %v704
        %v706 = vand.u32 %v705, 4294901760
        %707 = vmatpush1.msra.mxu0 %v706
        %708 = vmatprep.subr.mxu0 0.0
        %v709 = vand.u32 %v225, 4294901760
        %v710 = vsub.f32 %v225, %v709
        %v711 = vand.u32 %v710, 4294901760
        %712 = vmatpush1.msra.mxu0 %v711
        %713 = vmatprep.subr.mxu0 0.0
        %v714 = vand.u32 %v226, 4294901760
        %v715 = vsub.f32 %v226, %v714
        %v716 = vand.u32 %v715, 4294901760
        %717 = vmatpush1.msra.mxu0 %v716
        %718 = vmatprep.subr.mxu0 0.0
        %v719 = vand.u32 %v227, 4294901760
        %v720 = vsub.f32 %v227, %v719
        %v721 = vand.u32 %v720, 4294901760
        %722 = vmatpush1.msra.mxu0 %v721
        %723 = vmatprep.subr.mxu0 0.0
        %v724 = vand.u32 %v228, 4294901760
        %v725 = vsub.f32 %v228, %v724
        %v726 = vand.u32 %v725, 4294901760
        %727 = vmatpush1.msra.mxu0 %v726
        %728 = vmatprep.subr.mxu0 0.0
        %v729 = vand.u32 %v229, 4294901760
        %v730 = vsub.f32 %v229, %v729
        %v731 = vand.u32 %v730, 4294901760
        %732 = vmatpush1.msra.mxu0 %v731
        %733 = vmatprep.subr.mxu0 0.0
        %v734 = vand.u32 %v230, 4294901760
        %v735 = vsub.f32 %v230, %v734
        %v736 = vand.u32 %v735, 4294901760
        %737 = vmatpush1.msra.mxu0 %v736
        %738 = vmatprep.subr.mxu0 0.0
        %v739 = vand.u32 %v231, 4294901760
        %v740 = vsub.f32 %v231, %v739
        %v741 = vand.u32 %v740, 4294901760
        %742 = vmatpush1.msra.mxu0 %v741
        %743 = vmatprep.subr.mxu0 0.0
        %v744 = vand.u32 %v232, 4294901760
        %v745 = vsub.f32 %v232, %v744
        %v746 = vand.u32 %v745, 4294901760
        %747 = vmatpush1.msra.mxu0 %v746
        %748 = vmatprep.subr.mxu0 0.0
        %v749 = vand.u32 %v233, 4294901760
        %v750 = vsub.f32 %v233, %v749
        %v751 = vand.u32 %v750, 4294901760
        %752 = vmatpush1.msra.mxu0 %v751
        %753 = vmatprep.subr.mxu0 0.0
        %v754 = vand.u32 %v234, 4294901760
        %v755 = vsub.f32 %v234, %v754
        %v756 = vand.u32 %v755, 4294901760
        %757 = vmatpush1.msra.mxu0 %v756
        %758 = vmatprep.subr.mxu0 0.0
        %759 = vmatpush1.msra.mxu0 0.0
        %760 = vmatprep.subr.mxu0 0.0
        %761 = vmatpush1.msra.mxu0 0.0
        %762 = vmatprep.subr.mxu0 0.0
        %763 = vmatpush1.msra.mxu0 0.0
        %764 = vmatprep.subr.mxu0 0.0
        %765 = vmatpush1.msra.mxu0 0.0
        %766 = vmatprep.subr.mxu0 0.0
        %767 = vmatpush1.msra.mxu0 0.0
        %768 = vmatprep.subr.mxu0 0.0
        %769 = vmatpush1.msra.mxu0 0.0
        %770 = vmatprep.subr.mxu0 0.0
        %771 = vmatpush1.msra.mxu0 0.0
        %772 = vmatprep.subr.mxu0 0.0
        %773 = vmatpush1.msra.mxu0 0.0
        %774 = vmatprep.subr.mxu0 0.0
        %775 = vmatpush1.msra.mxu0 0.0
        %776 = vmatprep.subr.mxu0 0.0
        %777 = vmatpush1.msra.mxu0 0.0
        %778 = vmatprep.subr.mxu0 0.0
        %779 = vmatpush1.msra.mxu0 0.0
        %780 = vmatprep.subr.mxu0 0.0
        %781 = vmatpush1.msra.mxu0 0.0
        %782 = vmatprep.subr.mxu0 0.0
        %783 = vmatpush1.msra.mxu0 0.0
        %784 = vmatprep.subr.mxu0 0.0
        %785 = vmatpush1.msra.mxu0 0.0
        %786 = vmatprep.subr.mxu0 0.0
        %787 = vmatpush1.msra.mxu0 0.0
        %788 = vmatprep.subr.mxu0 0.0
        %789 = vmatpush1.msra.mxu0 0.0
        %790 = vmatprep.mubr.f32.mxu0 0.0
        %v791 = vand.u32 %v132, 4294901760
        %792 = vmatmul.mubr.f32.gmra.mrb[0].mxu0 %v791
        %v793 = vpop.f32.mrb[0].mxu0
        %v794 = vadd.f32 %v675, %v793
        %v795 = vpop.f32.mrb[0].mxu0
        %796 = vdwg.mxu0
        %797 = vmatprep.subr.mxu0 0.0
        %v798 = vand.u32 %v219, 4294901760
        %799 = vmatpush1.msra.mxu0 %v798
        %800 = vmatprep.subr.mxu0 0.0
        %v801 = vand.u32 %v220, 4294901760
        %802 = vmatpush1.msra.mxu0 %v801
        %803 = vmatprep.subr.mxu0 0.0
        %v804 = vand.u32 %v221, 4294901760
        %805 = vmatpush1.msra.mxu0 %v804
        %806 = vmatprep.subr.mxu0 0.0
        %v807 = vand.u32 %v222, 4294901760
        %808 = vmatpush1.msra.mxu0 %v807
        %809 = vmatprep.subr.mxu0 0.0
        %v810 = vand.u32 %v223, 4294901760
        %811 = vmatpush1.msra.mxu0 %v810
        %812 = vmatprep.subr.mxu0 0.0
        %v813 = vand.u32 %v224, 4294901760
        %814 = vmatpush1.msra.mxu0 %v813
        %815 = vmatprep.subr.mxu0 0.0
        %v816 = vand.u32 %v225, 4294901760
        %817 = vmatpush1.msra.mxu0 %v816
        %818 = vmatprep.subr.mxu0 0.0
        %v819 = vand.u32 %v226, 4294901760
        %820 = vmatpush1.msra.mxu0 %v819
        %821 = vmatprep.subr.mxu0 0.0
        %v822 = vand.u32 %v227, 4294901760
        %823 = vmatpush1.msra.mxu0 %v822
        %824 = vmatprep.subr.mxu0 0.0
        %v825 = vand.u32 %v228, 4294901760
        %826 = vmatpush1.msra.mxu0 %v825
        %827 = vmatprep.subr.mxu0 0.0
        %v828 = vand.u32 %v229, 4294901760
        %829 = vmatpush1.msra.mxu0 %v828
        %830 = vmatprep.subr.mxu0 0.0
        %v831 = vand.u32 %v230, 4294901760
        %832 = vmatpush1.msra.mxu0 %v831
        %833 = vmatprep.subr.mxu0 0.0
        %v834 = vand.u32 %v231, 4294901760
        %835 = vmatpush1.msra.mxu0 %v834
        %836 = vmatprep.subr.mxu0 0.0
        %v837 = vand.u32 %v232, 4294901760
        %838 = vmatpush1.msra.mxu0 %v837
        %839 = vmatprep.subr.mxu0 0.0
        %v840 = vand.u32 %v233, 4294901760
        %841 = vmatpush1.msra.mxu0 %v840
        %842 = vmatprep.subr.mxu0 0.0
        %v843 = vand.u32 %v234, 4294901760
        %844 = vmatpush1.msra.mxu0 %v843
        %845 = vmatprep.subr.mxu0 0.0
        %846 = vmatpush1.msra.mxu0 0.0
        %847 = vmatprep.subr.mxu0 0.0
        %848 = vmatpush1.msra.mxu0 0.0
        %849 = vmatprep.subr.mxu0 0.0
        %850 = vmatpush1.msra.mxu0 0.0
        %851 = vmatprep.subr.mxu0 0.0
        %852 = vmatpush1.msra.mxu0 0.0
        %853 = vmatprep.subr.mxu0 0.0
        %854 = vmatpush1.msra.mxu0 0.0
        %855 = vmatprep.subr.mxu0 0.0
        %856 = vmatpush1.msra.mxu0 0.0
        %857 = vmatprep.subr.mxu0 0.0
        %858 = vmatpush1.msra.mxu0 0.0
        %859 = vmatprep.subr.mxu0 0.0
        %860 = vmatpush1.msra.mxu0 0.0
        %861 = vmatprep.subr.mxu0 0.0
        %862 = vmatpush1.msra.mxu0 0.0
        %863 = vmatprep.subr.mxu0 0.0
        %864 = vmatpush1.msra.mxu0 0.0
        %865 = vmatprep.subr.mxu0 0.0
        %866 = vmatpush1.msra.mxu0 0.0
        %867 = vmatprep.subr.mxu0 0.0
        %868 = vmatpush1.msra.mxu0 0.0
        %869 = vmatprep.subr.mxu0 0.0
        %870 = vmatpush1.msra.mxu0 0.0
        %871 = vmatprep.subr.mxu0 0.0
        %872 = vmatpush1.msra.mxu0 0.0
        %873 = vmatprep.subr.mxu0 0.0
        %874 = vmatpush1.msra.mxu0 0.0
        %875 = vmatprep.subr.mxu0 0.0
        %876 = vmatpush1.msra.mxu0 0.0
        %877 = vmatprep.mubr.f32.mxu0 0.0
        %v878 = vand.u32 %v132, 4294901760
        %879 = vmatmul.mubr.f32.gmra.mrb[0].mxu0 %v878
        %v880 = vpop.f32.mrb[0].mxu0
        %v881 = vadd.f32 %v794, %v880
        %v882 = vpop.f32.mrb[0].mxu0
        %883 = vdwg.mxu0
        %v884 = vmul.f32 %v881, 0.0625
        %vm885 = vcmask 64512
        %v887 = vsel %vm885, %v884, 0
        %889 = vmatprep.subr.mxu0 0.0
        %v890 = vand.u32 %v242, 4294901760
        %891 = vmatpush1.msra.mxu0 %v890
        %892 = vmatprep.subr.mxu0 0.0
        %893 = vmatpush1.msra.mxu0 0.0
        %894 = vmatprep.subr.mxu0 0.0
        %895 = vmatpush1.msra.mxu0 0.0
        %896 = vmatprep.subr.mxu0 0.0
        %897 = vmatpush1.msra.mxu0 0.0
        %898 = vmatprep.subr.mxu0 0.0
        %899 = vmatpush1.msra.mxu0 0.0
        %900 = vmatprep.subr.mxu0 0.0
        %901 = vmatpush1.msra.mxu0 0.0
        %902 = vmatprep.subr.mxu0 0.0
        %903 = vmatpush1.msra.mxu0 0.0
        %904 = vmatprep.subr.mxu0 0.0
        %905 = vmatpush1.msra.mxu0 0.0
        %906 = vmatprep.subr.mxu0 0.0
        %907 = vmatpush1.msra.mxu0 0.0
        %908 = vmatprep.subr.mxu0 0.0
        %909 = vmatpush1.msra.mxu0 0.0
        %910 = vmatprep.subr.mxu0 0.0
        %911 = vmatpush1.msra.mxu0 0.0
        %912 = vmatprep.subr.mxu0 0.0
        %913 = vmatpush1.msra.mxu0 0.0
        %914 = vmatprep.subr.mxu0 0.0
        %915 = vmatpush1.msra.mxu0 0.0
        %916 = vmatprep.subr.mxu0 0.0
        %917 = vmatpush1.msra.mxu0 0.0
        %918 = vmatprep.subr.mxu0 0.0
        %919 = vmatpush1.msra.mxu0 0.0
        %920 = vmatprep.subr.mxu0 0.0
        %921 = vmatpush1.msra.mxu0 0.0
        %922 = vmatprep.subr.mxu0 0.0
        %923 = vmatpush1.msra.mxu0 0.0
        %924 = vmatprep.subr.mxu0 0.0
        %925 = vmatpush1.msra.mxu0 0.0
        %926 = vmatprep.subr.mxu0 0.0
        %927 = vmatpush1.msra.mxu0 0.0
        %928 = vmatprep.subr.mxu0 0.0
        %929 = vmatpush1.msra.mxu0 0.0
        %930 = vmatprep.subr.mxu0 0.0
        %931 = vmatpush1.msra.mxu0 0.0
        %932 = vmatprep.subr.mxu0 0.0
        %933 = vmatpush1.msra.mxu0 0.0
        %934 = vmatprep.subr.mxu0 0.0
        %935 = vmatpush1.msra.mxu0 0.0
        %936 = vmatprep.subr.mxu0 0.0
        %937 = vmatpush1.msra.mxu0 0.0
        %938 = vmatprep.subr.mxu0 0.0
        %939 = vmatpush1.msra.mxu0 0.0
        %940 = vmatprep.subr.mxu0 0.0
        %941 = vmatpush1.msra.mxu0 0.0
        %942 = vmatprep.subr.mxu0 0.0
        %943 = vmatpush1.msra.mxu0 0.0
        %944 = vmatprep.subr.mxu0 0.0
        %945 = vmatpush1.msra.mxu0 0.0
        %946 = vmatprep.subr.mxu0 0.0
        %947 = vmatpush1.msra.mxu0 0.0
        %948 = vmatprep.subr.mxu0 0.0
        %949 = vmatpush1.msra.mxu0 0.0
        %950 = vmatprep.subr.mxu0 0.0
        %951 = vmatpush1.msra.mxu0 0.0
        %952 = vmatprep.subr.mxu0 0.0
        %953 = vmatpush1.msra.mxu0 0.0
        %954 = vmatprep.mubr.f32.mxu0 0.0
        %v955 = vand.u32 %v887, 4294901760
        %v956 = vsub.f32 %v887, %v955
        %v957 = vand.u32 %v956, 4294901760
        %v958 = vsub.f32 %v956, %v957
        %v959 = vand.u32 %v958, 4294901760
        %960 = vmatmul.mubr.f32.gmra.mrb[0].mxu0 %v959
        %v961 = vpop.f32.mrb[0].mxu0
        %v962 = vadd.f32 0.0, %v961
        %v963 = vpop.f32.mrb[0].mxu0
        %964 = vdwg.mxu0
        %965 = vmatprep.subr.mxu0 0.0
        %v966 = vand.u32 %v242, 4294901760
        %v967 = vsub.f32 %v242, %v966
        %v968 = vand.u32 %v967, 4294901760
        %v969 = vsub.f32 %v967, %v968
        %v970 = vand.u32 %v969, 4294901760
        %971 = vmatpush1.msra.mxu0 %v970
        %972 = vmatprep.subr.mxu0 0.0
        %973 = vmatpush1.msra.mxu0 0.0
        %974 = vmatprep.subr.mxu0 0.0
        %975 = vmatpush1.msra.mxu0 0.0
        %976 = vmatprep.subr.mxu0 0.0
        %977 = vmatpush1.msra.mxu0 0.0
        %978 = vmatprep.subr.mxu0 0.0
        %979 = vmatpush1.msra.mxu0 0.0
        %980 = vmatprep.subr.mxu0 0.0
        %981 = vmatpush1.msra.mxu0 0.0
        %982 = vmatprep.subr.mxu0 0.0
        %983 = vmatpush1.msra.mxu0 0.0
        %984 = vmatprep.subr.mxu0 0.0
        %985 = vmatpush1.msra.mxu0 0.0
        %986 = vmatprep.subr.mxu0 0.0
        %987 = vmatpush1.msra.mxu0 0.0
        %988 = vmatprep.subr.mxu0 0.0
        %989 = vmatpush1.msra.mxu0 0.0
        %990 = vmatprep.subr.mxu0 0.0
        %991 = vmatpush1.msra.mxu0 0.0
        %992 = vmatprep.subr.mxu0 0.0
        %993 = vmatpush1.msra.mxu0 0.0
        %994 = vmatprep.subr.mxu0 0.0
        %995 = vmatpush1.msra.mxu0 0.0
        %996 = vmatprep.subr.mxu0 0.0
        %997 = vmatpush1.msra.mxu0 0.0
        %998 = vmatprep.subr.mxu0 0.0
        %999 = vmatpush1.msra.mxu0 0.0
        %1000 = vmatprep.subr.mxu0 0.0
        %1001 = vmatpush1.msra.mxu0 0.0
        %1002 = vmatprep.subr.mxu0 0.0
        %1003 = vmatpush1.msra.mxu0 0.0
        %1004 = vmatprep.subr.mxu0 0.0
        %1005 = vmatpush1.msra.mxu0 0.0
        %1006 = vmatprep.subr.mxu0 0.0
        %1007 = vmatpush1.msra.mxu0 0.0
        %1008 = vmatprep.subr.mxu0 0.0
        %1009 = vmatpush1.msra.mxu0 0.0
        %1010 = vmatprep.subr.mxu0 0.0
        %1011 = vmatpush1.msra.mxu0 0.0
        %1012 = vmatprep.subr.mxu0 0.0
        %1013 = vmatpush1.msra.mxu0 0.0
        %1014 = vmatprep.subr.mxu0 0.0
        %1015 = vmatpush1.msra.mxu0 0.0
        %1016 = vmatprep.subr.mxu0 0.0
        %1017 = vmatpush1.msra.mxu0 0.0
        %1018 = vmatprep.subr.mxu0 0.0
        %1019 = vmatpush1.msra.mxu0 0.0
        %1020 = vmatprep.subr.mxu0 0.0
        %1021 = vmatpush1.msra.mxu0 0.0
        %1022 = vmatprep.subr.mxu0 0.0
        %1023 = vmatpush1.msra.mxu0 0.0
        %1024 = vmatprep.subr.mxu0 0.0
        %1025 = vmatpush1.msra.mxu0 0.0
        %1026 = vmatprep.subr.mxu0 0.0
        %1027 = vmatpush1.msra.mxu0 0.0
        %1028 = vmatprep.subr.mxu0 0.0
        %1029 = vmatpush1.msra.mxu0 0.0
        %1030 = vmatprep.subr.mxu0 0.0
        %1031 = vmatpush1.msra.mxu0 0.0
        %1032 = vmatprep.subr.mxu0 0.0
        %1033 = vmatpush1.msra.mxu0 0.0
        %1034 = vmatprep.mubr.f32.mxu0 0.0
        %v1035 = vand.u32 %v887, 4294901760
        %1036 = vmatmul.mubr.f32.gmra.mrb[0].mxu0 %v1035
        %v1037 = vpop.f32.mrb[0].mxu0
        %v1038 = vadd.f32 %v962, %v1037
        %v1039 = vpop.f32.mrb[0].mxu0
        %1040 = vdwg.mxu0
        %1041 = vmatprep.subr.mxu0 0.0
        %v1042 = vand.u32 %v242, 4294901760
        %v1043 = vsub.f32 %v242, %v1042
        %1044 = vmatpush1.msra.mxu0 %v1043
        %1045 = vmatprep.subr.mxu0 0.0
        %1046 = vmatpush1.msra.mxu0 0.0
        %1047 = vmatprep.subr.mxu0 0.0
        %1048 = vmatpush1.msra.mxu0 0.0
        %1049 = vmatprep.subr.mxu0 0.0
        %1050 = vmatpush1.msra.mxu0 0.0
        %1051 = vmatprep.subr.mxu0 0.0
        %1052 = vmatpush1.msra.mxu0 0.0
        %1053 = vmatprep.subr.mxu0 0.0
        %1054 = vmatpush1.msra.mxu0 0.0
        %1055 = vmatprep.subr.mxu0 0.0
        %1056 = vmatpush1.msra.mxu0 0.0
        %1057 = vmatprep.subr.mxu0 0.0
        %1058 = vmatpush1.msra.mxu0 0.0
        %1059 = vmatprep.subr.mxu0 0.0
        %1060 = vmatpush1.msra.mxu0 0.0
        %1061 = vmatprep.subr.mxu0 0.0
        %1062 = vmatpush1.msra.mxu0 0.0
        %1063 = vmatprep.subr.mxu0 0.0
        %1064 = vmatpush1.msra.mxu0 0.0
        %1065 = vmatprep.subr.mxu0 0.0
        %1066 = vmatpush1.msra.mxu0 0.0
        %1067 = vmatprep.subr.mxu0 0.0
        %1068 = vmatpush1.msra.mxu0 0.0
        %1069 = vmatprep.subr.mxu0 0.0
        %1070 = vmatpush1.msra.mxu0 0.0
        %1071 = vmatprep.subr.mxu0 0.0
        %1072 = vmatpush1.msra.mxu0 0.0
        %1073 = vmatprep.subr.mxu0 0.0
        %1074 = vmatpush1.msra.mxu0 0.0
        %1075 = vmatprep.subr.mxu0 0.0
        %1076 = vmatpush1.msra.mxu0 0.0
        %1077 = vmatprep.subr.mxu0 0.0
        %1078 = vmatpush1.msra.mxu0 0.0
        %1079 = vmatprep.subr.mxu0 0.0
        %1080 = vmatpush1.msra.mxu0 0.0
        %1081 = vmatprep.subr.mxu0 0.0
        %1082 = vmatpush1.msra.mxu0 0.0
        %1083 = vmatprep.subr.mxu0 0.0
        %1084 = vmatpush1.msra.mxu0 0.0
        %1085 = vmatprep.subr.mxu0 0.0
        %1086 = vmatpush1.msra.mxu0 0.0
        %1087 = vmatprep.subr.mxu0 0.0
        %1088 = vmatpush1.msra.mxu0 0.0
        %1089 = vmatprep.subr.mxu0 0.0
        %1090 = vmatpush1.msra.mxu0 0.0
        %1091 = vmatprep.subr.mxu0 0.0
        %1092 = vmatpush1.msra.mxu0 0.0
        %1093 = vmatprep.subr.mxu0 0.0
        %1094 = vmatpush1.msra.mxu0 0.0
        %1095 = vmatprep.subr.mxu0 0.0
        %1096 = vmatpush1.msra.mxu0 0.0
        %1097 = vmatprep.subr.mxu0 0.0
        %1098 = vmatpush1.msra.mxu0 0.0
        %1099 = vmatprep.subr.mxu0 0.0
        %1100 = vmatpush1.msra.mxu0 0.0
        %1101 = vmatprep.subr.mxu0 0.0
        %1102 = vmatpush1.msra.mxu0 0.0
        %1103 = vmatprep.subr.mxu0 0.0
        %1104 = vmatpush1.msra.mxu0 0.0
        %1105 = vmatprep.subr.mxu0 0.0
        %1106 = vmatpush1.msra.mxu0 0.0
        %1107 = vmatprep.mubr.f32.mxu0 0.0
        %v1108 = vand.u32 %v887, 4294901760
        %v1109 = vsub.f32 %v887, %v1108
        %1110 = vmatmul.mubr.f32.gmra.mrb[0].mxu0 %v1109
        %v1111 = vpop.f32.mrb[0].mxu0
        %v1112 = vadd.f32 %v1038, %v1111
        %v1113 = vpop.f32.mrb[0].mxu0
        %1114 = vdwg.mxu0
        %1115 = vmatprep.subr.mxu0 0.0
        %v1116 = vand.u32 %v242, 4294901760
        %1117 = vmatpush1.msra.mxu0 %v1116
        %1118 = vmatprep.subr.mxu0 0.0
        %1119 = vmatpush1.msra.mxu0 0.0
        %1120 = vmatprep.subr.mxu0 0.0
        %1121 = vmatpush1.msra.mxu0 0.0
        %1122 = vmatprep.subr.mxu0 0.0
        %1123 = vmatpush1.msra.mxu0 0.0
        %1124 = vmatprep.subr.mxu0 0.0
        %1125 = vmatpush1.msra.mxu0 0.0
        %1126 = vmatprep.subr.mxu0 0.0
        %1127 = vmatpush1.msra.mxu0 0.0
        %1128 = vmatprep.subr.mxu0 0.0
        %1129 = vmatpush1.msra.mxu0 0.0
        %1130 = vmatprep.subr.mxu0 0.0
        %1131 = vmatpush1.msra.mxu0 0.0
        %1132 = vmatprep.subr.mxu0 0.0
        %1133 = vmatpush1.msra.mxu0 0.0
        %1134 = vmatprep.subr.mxu0 0.0
        %1135 = vmatpush1.msra.mxu0 0.0
        %1136 = vmatprep.subr.mxu0 0.0
        %1137 = vmatpush1.msra.mxu0 0.0
        %1138 = vmatprep.subr.mxu0 0.0
        %1139 = vmatpush1.msra.mxu0 0.0
        %1140 = vmatprep.subr.mxu0 0.0
        %1141 = vmatpush1.msra.mxu0 0.0
        %1142 = vmatprep.subr.mxu0 0.0
        %1143 = vmatpush1.msra.mxu0 0.0
        %1144 = vmatprep.subr.mxu0 0.0
        %1145 = vmatpush1.msra.mxu0 0.0
        %1146 = vmatprep.subr.mxu0 0.0
        %1147 = vmatpush1.msra.mxu0 0.0
        %1148 = vmatprep.subr.mxu0 0.0
        %1149 = vmatpush1.msra.mxu0 0.0
        %1150 = vmatprep.subr.mxu0 0.0
        %1151 = vmatpush1.msra.mxu0 0.0
        %1152 = vmatprep.subr.mxu0 0.0
        %1153 = vmatpush1.msra.mxu0 0.0
        %1154 = vmatprep.subr.mxu0 0.0
        %1155 = vmatpush1.msra.mxu0 0.0
        %1156 = vmatprep.subr.mxu0 0.0
        %1157 = vmatpush1.msra.mxu0 0.0
        %1158 = vmatprep.subr.mxu0 0.0
        %1159 = vmatpush1.msra.mxu0 0.0
        %1160 = vmatprep.subr.mxu0 0.0
        %1161 = vmatpush1.msra.mxu0 0.0
        %1162 = vmatprep.subr.mxu0 0.0
        %1163 = vmatpush1.msra.mxu0 0.0
        %1164 = vmatprep.subr.mxu0 0.0
        %1165 = vmatpush1.msra.mxu0 0.0
        %1166 = vmatprep.subr.mxu0 0.0
        %1167 = vmatpush1.msra.mxu0 0.0
        %1168 = vmatprep.subr.mxu0 0.0
        %1169 = vmatpush1.msra.mxu0 0.0
        %1170 = vmatprep.subr.mxu0 0.0
        %1171 = vmatpush1.msra.mxu0 0.0
        %1172 = vmatprep.subr.mxu0 0.0
        %1173 = vmatpush1.msra.mxu0 0.0
        %1174 = vmatprep.subr.mxu0 0.0
        %1175 = vmatpush1.msra.mxu0 0.0
        %1176 = vmatprep.subr.mxu0 0.0
        %1177 = vmatpush1.msra.mxu0 0.0
        %1178 = vmatprep.subr.mxu0 0.0
        %1179 = vmatpush1.msra.mxu0 0.0
        %1180 = vmatprep.mubr.f32.mxu0 0.0
        %v1181 = vand.u32 %v887, 4294901760
        %v1182 = vsub.f32 %v887, %v1181
        %v1183 = vand.u32 %v1182, 4294901760
        %1184 = vmatmul.mubr.f32.gmra.mrb[0].mxu0 %v1183
        %v1185 = vpop.f32.mrb[0].mxu0
        %v1186 = vadd.f32 %v1112, %v1185
        %v1187 = vpop.f32.mrb[0].mxu0
        %1188 = vdwg.mxu0
        %1189 = vmatprep.subr.mxu0 0.0
        %v1190 = vand.u32 %v242, 4294901760
        %v1191 = vsub.f32 %v242, %v1190
        %v1192 = vand.u32 %v1191, 4294901760
        %1193 = vmatpush1.msra.mxu0 %v1192
        %1194 = vmatprep.subr.mxu0 0.0
        %1195 = vmatpush1.msra.mxu0 0.0
        %1196 = vmatprep.subr.mxu0 0.0
        %1197 = vmatpush1.msra.mxu0 0.0
        %1198 = vmatprep.subr.mxu0 0.0
        %1199 = vmatpush1.msra.mxu0 0.0
        %1200 = vmatprep.subr.mxu0 0.0
        %1201 = vmatpush1.msra.mxu0 0.0
        %1202 = vmatprep.subr.mxu0 0.0
        %1203 = vmatpush1.msra.mxu0 0.0
        %1204 = vmatprep.subr.mxu0 0.0
        %1205 = vmatpush1.msra.mxu0 0.0
        %1206 = vmatprep.subr.mxu0 0.0
        %1207 = vmatpush1.msra.mxu0 0.0
        %1208 = vmatprep.subr.mxu0 0.0
        %1209 = vmatpush1.msra.mxu0 0.0
        %1210 = vmatprep.subr.mxu0 0.0
        %1211 = vmatpush1.msra.mxu0 0.0
        %1212 = vmatprep.subr.mxu0 0.0
        %1213 = vmatpush1.msra.mxu0 0.0
        %1214 = vmatprep.subr.mxu0 0.0
        %1215 = vmatpush1.msra.mxu0 0.0
        %1216 = vmatprep.subr.mxu0 0.0
        %1217 = vmatpush1.msra.mxu0 0.0
        %1218 = vmatprep.subr.mxu0 0.0
        %1219 = vmatpush1.msra.mxu0 0.0
        %1220 = vmatprep.subr.mxu0 0.0
        %1221 = vmatpush1.msra.mxu0 0.0
        %1222 = vmatprep.subr.mxu0 0.0
        %1223 = vmatpush1.msra.mxu0 0.0
        %1224 = vmatprep.subr.mxu0 0.0
        %1225 = vmatpush1.msra.mxu0 0.0
        %1226 = vmatprep.subr.mxu0 0.0
        %1227 = vmatpush1.msra.mxu0 0.0
        %1228 = vmatprep.subr.mxu0 0.0
        %1229 = vmatpush1.msra.mxu0 0.0
        %1230 = vmatprep.subr.mxu0 0.0
        %1231 = vmatpush1.msra.mxu0 0.0
        %1232 = vmatprep.subr.mxu0 0.0
        %1233 = vmatpush1.msra.mxu0 0.0
        %1234 = vmatprep.subr.mxu0 0.0
        %1235 = vmatpush1.msra.mxu0 0.0
        %1236 = vmatprep.subr.mxu0 0.0
        %1237 = vmatpush1.msra.mxu0 0.0
        %1238 = vmatprep.subr.mxu0 0.0
        %1239 = vmatpush1.msra.mxu0 0.0
        %1240 = vmatprep.subr.mxu0 0.0
        %1241 = vmatpush1.msra.mxu0 0.0
        %1242 = vmatprep.subr.mxu0 0.0
        %1243 = vmatpush1.msra.mxu0 0.0
        %1244 = vmatprep.subr.mxu0 0.0
        %1245 = vmatpush1.msra.mxu0 0.0
        %1246 = vmatprep.subr.mxu0 0.0
        %1247 = vmatpush1.msra.mxu0 0.0
        %1248 = vmatprep.subr.mxu0 0.0
        %1249 = vmatpush1.msra.mxu0 0.0
        %1250 = vmatprep.subr.mxu0 0.0
        %1251 = vmatpush1.msra.mxu0 0.0
        %1252 = vmatprep.subr.mxu0 0.0
        %1253 = vmatpush1.msra.mxu0 0.0
        %1254 = vmatprep.subr.mxu0 0.0
        %1255 = vmatpush1.msra.mxu0 0.0
        %1256 = vmatprep.mubr.f32.mxu0 0.0
        %v1257 = vand.u32 %v887, 4294901760
        %1258 = vmatmul.mubr.f32.gmra.mrb[0].mxu0 %v1257
        %v1259 = vpop.f32.mrb[0].mxu0
        %v1260 = vadd.f32 %v1186, %v1259
        %v1261 = vpop.f32.mrb[0].mxu0
        %1262 = vdwg.mxu0
        %1263 = vmatprep.subr.mxu0 0.0
        %v1264 = vand.u32 %v242, 4294901760
        %1265 = vmatpush1.msra.mxu0 %v1264
        %1266 = vmatprep.subr.mxu0 0.0
        %1267 = vmatpush1.msra.mxu0 0.0
        %1268 = vmatprep.subr.mxu0 0.0
        %1269 = vmatpush1.msra.mxu0 0.0
        %1270 = vmatprep.subr.mxu0 0.0
        %1271 = vmatpush1.msra.mxu0 0.0
        %1272 = vmatprep.subr.mxu0 0.0
        %1273 = vmatpush1.msra.mxu0 0.0
        %1274 = vmatprep.subr.mxu0 0.0
        %1275 = vmatpush1.msra.mxu0 0.0
        %1276 = vmatprep.subr.mxu0 0.0
        %1277 = vmatpush1.msra.mxu0 0.0
        %1278 = vmatprep.subr.mxu0 0.0
        %1279 = vmatpush1.msra.mxu0 0.0
        %1280 = vmatprep.subr.mxu0 0.0
        %1281 = vmatpush1.msra.mxu0 0.0
        %1282 = vmatprep.subr.mxu0 0.0
        %1283 = vmatpush1.msra.mxu0 0.0
        %1284 = vmatprep.subr.mxu0 0.0
        %1285 = vmatpush1.msra.mxu0 0.0
        %1286 = vmatprep.subr.mxu0 0.0
        %1287 = vmatpush1.msra.mxu0 0.0
        %1288 = vmatprep.subr.mxu0 0.0
        %1289 = vmatpush1.msra.mxu0 0.0
        %1290 = vmatprep.subr.mxu0 0.0
        %1291 = vmatpush1.msra.mxu0 0.0
        %1292 = vmatprep.subr.mxu0 0.0
        %1293 = vmatpush1.msra.mxu0 0.0
        %1294 = vmatprep.subr.mxu0 0.0
        %1295 = vmatpush1.msra.mxu0 0.0
        %1296 = vmatprep.subr.mxu0 0.0
        %1297 = vmatpush1.msra.mxu0 0.0
        %1298 = vmatprep.subr.mxu0 0.0
        %1299 = vmatpush1.msra.mxu0 0.0
        %1300 = vmatprep.subr.mxu0 0.0
        %1301 = vmatpush1.msra.mxu0 0.0
        %1302 = vmatprep.subr.mxu0 0.0
        %1303 = vmatpush1.msra.mxu0 0.0
        %1304 = vmatprep.subr.mxu0 0.0
        %1305 = vmatpush1.msra.mxu0 0.0
        %1306 = vmatprep.subr.mxu0 0.0
        %1307 = vmatpush1.msra.mxu0 0.0
        %1308 = vmatprep.subr.mxu0 0.0
        %1309 = vmatpush1.msra.mxu0 0.0
        %1310 = vmatprep.subr.mxu0 0.0
        %1311 = vmatpush1.msra.mxu0 0.0
        %1312 = vmatprep.subr.mxu0 0.0
        %1313 = vmatpush1.msra.mxu0 0.0
        %1314 = vmatprep.subr.mxu0 0.0
        %1315 = vmatpush1.msra.mxu0 0.0
        %1316 = vmatprep.subr.mxu0 0.0
        %1317 = vmatpush1.msra.mxu0 0.0
        %1318 = vmatprep.subr.mxu0 0.0
        %1319 = vmatpush1.msra.mxu0 0.0
        %1320 = vmatprep.subr.mxu0 0.0
        %1321 = vmatpush1.msra.mxu0 0.0
        %1322 = vmatprep.subr.mxu0 0.0
        %1323 = vmatpush1.msra.mxu0 0.0
        %1324 = vmatprep.subr.mxu0 0.0
        %1325 = vmatpush1.msra.mxu0 0.0
        %1326 = vmatprep.subr.mxu0 0.0
        %1327 = vmatpush1.msra.mxu0 0.0
        %1328 = vmatprep.mubr.f32.mxu0 0.0
        %v1329 = vand.u32 %v887, 4294901760
        %1330 = vmatmul.mubr.f32.gmra.mrb[0].mxu0 %v1329
        %v1331 = vpop.f32.mrb[0].mxu0
        %v1332 = vadd.f32 %v1260, %v1331
        %v1333 = vpop.f32.mrb[0].mxu0
        %1334 = vdwg.mxu0
        %v1335 = vsub.f32 %v132, %v1332
        %v1336 = vmul.f32 %v1335, %v1335
        %1337 = vmatprep.subr.mxu0 0.0
        %v1338 = vand.u32 %v219, 4294901760
        %1339 = vmatpush1.msra.mxu0 %v1338
        %1340 = vmatprep.subr.mxu0 0.0
        %v1341 = vand.u32 %v220, 4294901760
        %1342 = vmatpush1.msra.mxu0 %v1341
        %1343 = vmatprep.subr.mxu0 0.0
        %v1344 = vand.u32 %v221, 4294901760
        %1345 = vmatpush1.msra.mxu0 %v1344
        %1346 = vmatprep.subr.mxu0 0.0
        %v1347 = vand.u32 %v222, 4294901760
        %1348 = vmatpush1.msra.mxu0 %v1347
        %1349 = vmatprep.subr.mxu0 0.0
        %v1350 = vand.u32 %v223, 4294901760
        %1351 = vmatpush1.msra.mxu0 %v1350
        %1352 = vmatprep.subr.mxu0 0.0
        %v1353 = vand.u32 %v224, 4294901760
        %1354 = vmatpush1.msra.mxu0 %v1353
        %1355 = vmatprep.subr.mxu0 0.0
        %v1356 = vand.u32 %v225, 4294901760
        %1357 = vmatpush1.msra.mxu0 %v1356
        %1358 = vmatprep.subr.mxu0 0.0
        %v1359 = vand.u32 %v226, 4294901760
        %1360 = vmatpush1.msra.mxu0 %v1359
        %1361 = vmatprep.subr.mxu0 0.0
        %v1362 = vand.u32 %v227, 4294901760
        %1363 = vmatpush1.msra.mxu0 %v1362
        %1364 = vmatprep.subr.mxu0 0.0
        %v1365 = vand.u32 %v228, 4294901760
        %1366 = vmatpush1.msra.mxu0 %v1365
        %1367 = vmatprep.subr.mxu0 0.0
        %v1368 = vand.u32 %v229, 4294901760
        %1369 = vmatpush1.msra.mxu0 %v1368
        %1370 = vmatprep.subr.mxu0 0.0
        %v1371 = vand.u32 %v230, 4294901760
        %1372 = vmatpush1.msra.mxu0 %v1371
        %1373 = vmatprep.subr.mxu0 0.0
        %v1374 = vand.u32 %v231, 4294901760
        %1375 = vmatpush1.msra.mxu0 %v1374
        %1376 = vmatprep.subr.mxu0 0.0
        %v1377 = vand.u32 %v232, 4294901760
        %1378 = vmatpush1.msra.mxu0 %v1377
        %1379 = vmatprep.subr.mxu0 0.0
        %v1380 = vand.u32 %v233, 4294901760
        %1381 = vmatpush1.msra.mxu0 %v1380
        %1382 = vmatprep.subr.mxu0 0.0
        %v1383 = vand.u32 %v234, 4294901760
        %1384 = vmatpush1.msra.mxu0 %v1383
        %1385 = vmatprep.subr.mxu0 0.0
        %1386 = vmatpush1.msra.mxu0 0.0
        %1387 = vmatprep.subr.mxu0 0.0
        %1388 = vmatpush1.msra.mxu0 0.0
        %1389 = vmatprep.subr.mxu0 0.0
        %1390 = vmatpush1.msra.mxu0 0.0
        %1391 = vmatprep.subr.mxu0 0.0
        %1392 = vmatpush1.msra.mxu0 0.0
        %1393 = vmatprep.subr.mxu0 0.0
        %1394 = vmatpush1.msra.mxu0 0.0
        %1395 = vmatprep.subr.mxu0 0.0
        %1396 = vmatpush1.msra.mxu0 0.0
        %1397 = vmatprep.subr.mxu0 0.0
        %1398 = vmatpush1.msra.mxu0 0.0
        %1399 = vmatprep.subr.mxu0 0.0
        %1400 = vmatpush1.msra.mxu0 0.0
        %1401 = vmatprep.subr.mxu0 0.0
        %1402 = vmatpush1.msra.mxu0 0.0
        %1403 = vmatprep.subr.mxu0 0.0
        %1404 = vmatpush1.msra.mxu0 0.0
        %1405 = vmatprep.subr.mxu0 0.0
        %1406 = vmatpush1.msra.mxu0 0.0
        %1407 = vmatprep.subr.mxu0 0.0
        %1408 = vmatpush1.msra.mxu0 0.0
        %1409 = vmatprep.subr.mxu0 0.0
        %1410 = vmatpush1.msra.mxu0 0.0
        %1411 = vmatprep.subr.mxu0 0.0
        %1412 = vmatpush1.msra.mxu0 0.0
        %1413 = vmatprep.subr.mxu0 0.0
        %1414 = vmatpush1.msra.mxu0 0.0
        %1415 = vmatprep.subr.mxu0 0.0
        %1416 = vmatpush1.msra.mxu0 0.0
        %1417 = vmatprep.mubr.f32.mxu0 0.0
        %v1418 = vand.u32 %v1336, 4294901760
        %v1419 = vsub.f32 %v1336, %v1418
        %v1420 = vand.u32 %v1419, 4294901760
        %v1421 = vsub.f32 %v1419, %v1420
        %v1422 = vand.u32 %v1421, 4294901760
        %1423 = vmatmul.mubr.f32.gmra.mrb[0].mxu0 %v1422
        %v1424 = vpop.f32.mrb[0].mxu0
        %v1425 = vadd.f32 0.0, %v1424
        %v1426 = vpop.f32.mrb[0].mxu0
        %1427 = vdwg.mxu0
        %1428 = vmatprep.subr.mxu0 0.0
        %v1429 = vand.u32 %v219, 4294901760
        %v1430 = vsub.f32 %v219, %v1429
        %v1431 = vand.u32 %v1430, 4294901760
        %v1432 = vsub.f32 %v1430, %v1431
        %v1433 = vand.u32 %v1432, 4294901760
        %1434 = vmatpush1.msra.mxu0 %v1433
        %1435 = vmatprep.subr.mxu0 0.0
        %v1436 = vand.u32 %v220, 4294901760
        %v1437 = vsub.f32 %v220, %v1436
        %v1438 = vand.u32 %v1437, 4294901760
        %v1439 = vsub.f32 %v1437, %v1438
        %v1440 = vand.u32 %v1439, 4294901760
        %1441 = vmatpush1.msra.mxu0 %v1440
        %1442 = vmatprep.subr.mxu0 0.0
        %v1443 = vand.u32 %v221, 4294901760
        %v1444 = vsub.f32 %v221, %v1443
        %v1445 = vand.u32 %v1444, 4294901760
        %v1446 = vsub.f32 %v1444, %v1445
        %v1447 = vand.u32 %v1446, 4294901760
        %1448 = vmatpush1.msra.mxu0 %v1447
        %1449 = vmatprep.subr.mxu0 0.0
        %v1450 = vand.u32 %v222, 4294901760
        %v1451 = vsub.f32 %v222, %v1450
        %v1452 = vand.u32 %v1451, 4294901760
        %v1453 = vsub.f32 %v1451, %v1452
        %v1454 = vand.u32 %v1453, 4294901760
        %1455 = vmatpush1.msra.mxu0 %v1454
        %1456 = vmatprep.subr.mxu0 0.0
        %v1457 = vand.u32 %v223, 4294901760
        %v1458 = vsub.f32 %v223, %v1457
        %v1459 = vand.u32 %v1458, 4294901760
        %v1460 = vsub.f32 %v1458, %v1459
        %v1461 = vand.u32 %v1460, 4294901760
        %1462 = vmatpush1.msra.mxu0 %v1461
        %1463 = vmatprep.subr.mxu0 0.0
        %v1464 = vand.u32 %v224, 4294901760
        %v1465 = vsub.f32 %v224, %v1464
        %v1466 = vand.u32 %v1465, 4294901760
        %v1467 = vsub.f32 %v1465, %v1466
        %v1468 = vand.u32 %v1467, 4294901760
        %1469 = vmatpush1.msra.mxu0 %v1468
        %1470 = vmatprep.subr.mxu0 0.0
        %v1471 = vand.u32 %v225, 4294901760
        %v1472 = vsub.f32 %v225, %v1471
        %v1473 = vand.u32 %v1472, 4294901760
        %v1474 = vsub.f32 %v1472, %v1473
        %v1475 = vand.u32 %v1474, 4294901760
        %1476 = vmatpush1.msra.mxu0 %v1475
        %1477 = vmatprep.subr.mxu0 0.0
        %v1478 = vand.u32 %v226, 4294901760
        %v1479 = vsub.f32 %v226, %v1478
        %v1480 = vand.u32 %v1479, 4294901760
        %v1481 = vsub.f32 %v1479, %v1480
        %v1482 = vand.u32 %v1481, 4294901760
        %1483 = vmatpush1.msra.mxu0 %v1482
        %1484 = vmatprep.subr.mxu0 0.0
        %v1485 = vand.u32 %v227, 4294901760
        %v1486 = vsub.f32 %v227, %v1485
        %v1487 = vand.u32 %v1486, 4294901760
        %v1488 = vsub.f32 %v1486, %v1487
        %v1489 = vand.u32 %v1488, 4294901760
        %1490 = vmatpush1.msra.mxu0 %v1489
        %1491 = vmatprep.subr.mxu0 0.0
        %v1492 = vand.u32 %v228, 4294901760
        %v1493 = vsub.f32 %v228, %v1492
        %v1494 = vand.u32 %v1493, 4294901760
        %v1495 = vsub.f32 %v1493, %v1494
        %v1496 = vand.u32 %v1495, 4294901760
        %1497 = vmatpush1.msra.mxu0 %v1496
        %1498 = vmatprep.subr.mxu0 0.0
        %v1499 = vand.u32 %v229, 4294901760
        %v1500 = vsub.f32 %v229, %v1499
        %v1501 = vand.u32 %v1500, 4294901760
        %v1502 = vsub.f32 %v1500, %v1501
        %v1503 = vand.u32 %v1502, 4294901760
        %1504 = vmatpush1.msra.mxu0 %v1503
        %1505 = vmatprep.subr.mxu0 0.0
        %v1506 = vand.u32 %v230, 4294901760
        %v1507 = vsub.f32 %v230, %v1506
        %v1508 = vand.u32 %v1507, 4294901760
        %v1509 = vsub.f32 %v1507, %v1508
        %v1510 = vand.u32 %v1509, 4294901760
        %1511 = vmatpush1.msra.mxu0 %v1510
        %1512 = vmatprep.subr.mxu0 0.0
        %v1513 = vand.u32 %v231, 4294901760
        %v1514 = vsub.f32 %v231, %v1513
        %v1515 = vand.u32 %v1514, 4294901760
        %v1516 = vsub.f32 %v1514, %v1515
        %v1517 = vand.u32 %v1516, 4294901760
        %1518 = vmatpush1.msra.mxu0 %v1517
        %1519 = vmatprep.subr.mxu0 0.0
        %v1520 = vand.u32 %v232, 4294901760
        %v1521 = vsub.f32 %v232, %v1520
        %v1522 = vand.u32 %v1521, 4294901760
        %v1523 = vsub.f32 %v1521, %v1522
        %v1524 = vand.u32 %v1523, 4294901760
        %1525 = vmatpush1.msra.mxu0 %v1524
        %1526 = vmatprep.subr.mxu0 0.0
        %v1527 = vand.u32 %v233, 4294901760
        %v1528 = vsub.f32 %v233, %v1527
        %v1529 = vand.u32 %v1528, 4294901760
        %v1530 = vsub.f32 %v1528, %v1529
        %v1531 = vand.u32 %v1530, 4294901760
        %1532 = vmatpush1.msra.mxu0 %v1531
        %1533 = vmatprep.subr.mxu0 0.0
        %v1534 = vand.u32 %v234, 4294901760
        %v1535 = vsub.f32 %v234, %v1534
        %v1536 = vand.u32 %v1535, 4294901760
        %v1537 = vsub.f32 %v1535, %v1536
        %v1538 = vand.u32 %v1537, 4294901760
        %1539 = vmatpush1.msra.mxu0 %v1538
        %1540 = vmatprep.subr.mxu0 0.0
        %1541 = vmatpush1.msra.mxu0 0.0
        %1542 = vmatprep.subr.mxu0 0.0
        %1543 = vmatpush1.msra.mxu0 0.0
        %1544 = vmatprep.subr.mxu0 0.0
        %1545 = vmatpush1.msra.mxu0 0.0
        %1546 = vmatprep.subr.mxu0 0.0
        %1547 = vmatpush1.msra.mxu0 0.0
        %1548 = vmatprep.subr.mxu0 0.0
        %1549 = vmatpush1.msra.mxu0 0.0
        %1550 = vmatprep.subr.mxu0 0.0
        %1551 = vmatpush1.msra.mxu0 0.0
        %1552 = vmatprep.subr.mxu0 0.0
        %1553 = vmatpush1.msra.mxu0 0.0
        %1554 = vmatprep.subr.mxu0 0.0
        %1555 = vmatpush1.msra.mxu0 0.0
        %1556 = vmatprep.subr.mxu0 0.0
        %1557 = vmatpush1.msra.mxu0 0.0
        %1558 = vmatprep.subr.mxu0 0.0
        %1559 = vmatpush1.msra.mxu0 0.0
        %1560 = vmatprep.subr.mxu0 0.0
        %1561 = vmatpush1.msra.mxu0 0.0
        %1562 = vmatprep.subr.mxu0 0.0
        %1563 = vmatpush1.msra.mxu0 0.0
        %1564 = vmatprep.subr.mxu0 0.0
        %1565 = vmatpush1.msra.mxu0 0.0
        %1566 = vmatprep.subr.mxu0 0.0
        %1567 = vmatpush1.msra.mxu0 0.0
        %1568 = vmatprep.subr.mxu0 0.0
        %1569 = vmatpush1.msra.mxu0 0.0
        %1570 = vmatprep.subr.mxu0 0.0
        %1571 = vmatpush1.msra.mxu0 0.0
        %1572 = vmatprep.mubr.f32.mxu0 0.0
        %v1573 = vand.u32 %v1336, 4294901760
        %1574 = vmatmul.mubr.f32.gmra.mrb[0].mxu0 %v1573
        %v1575 = vpop.f32.mrb[0].mxu0
        %v1576 = vadd.f32 %v1425, %v1575
        %v1577 = vpop.f32.mrb[0].mxu0
        %1578 = vdwg.mxu0
        %1579 = vmatprep.subr.mxu0 0.0
        %v1580 = vand.u32 %v219, 4294901760
        %v1581 = vsub.f32 %v219, %v1580
        %1582 = vmatpush1.msra.mxu0 %v1581
        %1583 = vmatprep.subr.mxu0 0.0
        %v1584 = vand.u32 %v220, 4294901760
        %v1585 = vsub.f32 %v220, %v1584
        %1586 = vmatpush1.msra.mxu0 %v1585
        %1587 = vmatprep.subr.mxu0 0.0
        %v1588 = vand.u32 %v221, 4294901760
        %v1589 = vsub.f32 %v221, %v1588
        %1590 = vmatpush1.msra.mxu0 %v1589
        %1591 = vmatprep.subr.mxu0 0.0
        %v1592 = vand.u32 %v222, 4294901760
        %v1593 = vsub.f32 %v222, %v1592
        %1594 = vmatpush1.msra.mxu0 %v1593
        %1595 = vmatprep.subr.mxu0 0.0
        %v1596 = vand.u32 %v223, 4294901760
        %v1597 = vsub.f32 %v223, %v1596
        %1598 = vmatpush1.msra.mxu0 %v1597
        %1599 = vmatprep.subr.mxu0 0.0
        %v1600 = vand.u32 %v224, 4294901760
        %v1601 = vsub.f32 %v224, %v1600
        %1602 = vmatpush1.msra.mxu0 %v1601
        %1603 = vmatprep.subr.mxu0 0.0
        %v1604 = vand.u32 %v225, 4294901760
        %v1605 = vsub.f32 %v225, %v1604
        %1606 = vmatpush1.msra.mxu0 %v1605
        %1607 = vmatprep.subr.mxu0 0.0
        %v1608 = vand.u32 %v226, 4294901760
        %v1609 = vsub.f32 %v226, %v1608
        %1610 = vmatpush1.msra.mxu0 %v1609
        %1611 = vmatprep.subr.mxu0 0.0
        %v1612 = vand.u32 %v227, 4294901760
        %v1613 = vsub.f32 %v227, %v1612
        %1614 = vmatpush1.msra.mxu0 %v1613
        %1615 = vmatprep.subr.mxu0 0.0
        %v1616 = vand.u32 %v228, 4294901760
        %v1617 = vsub.f32 %v228, %v1616
        %1618 = vmatpush1.msra.mxu0 %v1617
        %1619 = vmatprep.subr.mxu0 0.0
        %v1620 = vand.u32 %v229, 4294901760
        %v1621 = vsub.f32 %v229, %v1620
        %1622 = vmatpush1.msra.mxu0 %v1621
        %1623 = vmatprep.subr.mxu0 0.0
        %v1624 = vand.u32 %v230, 4294901760
        %v1625 = vsub.f32 %v230, %v1624
        %1626 = vmatpush1.msra.mxu0 %v1625
        %1627 = vmatprep.subr.mxu0 0.0
        %v1628 = vand.u32 %v231, 4294901760
        %v1629 = vsub.f32 %v231, %v1628
        %1630 = vmatpush1.msra.mxu0 %v1629
        %1631 = vmatprep.subr.mxu0 0.0
        %v1632 = vand.u32 %v232, 4294901760
        %v1633 = vsub.f32 %v232, %v1632
        %1634 = vmatpush1.msra.mxu0 %v1633
        %1635 = vmatprep.subr.mxu0 0.0
        %v1636 = vand.u32 %v233, 4294901760
        %v1637 = vsub.f32 %v233, %v1636
        %1638 = vmatpush1.msra.mxu0 %v1637
        %1639 = vmatprep.subr.mxu0 0.0
        %v1640 = vand.u32 %v234, 4294901760
        %v1641 = vsub.f32 %v234, %v1640
        %1642 = vmatpush1.msra.mxu0 %v1641
        %1643 = vmatprep.subr.mxu0 0.0
        %1644 = vmatpush1.msra.mxu0 0.0
        %1645 = vmatprep.subr.mxu0 0.0
        %1646 = vmatpush1.msra.mxu0 0.0
        %1647 = vmatprep.subr.mxu0 0.0
        %1648 = vmatpush1.msra.mxu0 0.0
        %1649 = vmatprep.subr.mxu0 0.0
        %1650 = vmatpush1.msra.mxu0 0.0
        %1651 = vmatprep.subr.mxu0 0.0
        %1652 = vmatpush1.msra.mxu0 0.0
        %1653 = vmatprep.subr.mxu0 0.0
        %1654 = vmatpush1.msra.mxu0 0.0
        %1655 = vmatprep.subr.mxu0 0.0
        %1656 = vmatpush1.msra.mxu0 0.0
        %1657 = vmatprep.subr.mxu0 0.0
        %1658 = vmatpush1.msra.mxu0 0.0
        %1659 = vmatprep.subr.mxu0 0.0
        %1660 = vmatpush1.msra.mxu0 0.0
        %1661 = vmatprep.subr.mxu0 0.0
        %1662 = vmatpush1.msra.mxu0 0.0
        %1663 = vmatprep.subr.mxu0 0.0
        %1664 = vmatpush1.msra.mxu0 0.0
        %1665 = vmatprep.subr.mxu0 0.0
        %1666 = vmatpush1.msra.mxu0 0.0
        %1667 = vmatprep.subr.mxu0 0.0
        %1668 = vmatpush1.msra.mxu0 0.0
        %1669 = vmatprep.subr.mxu0 0.0
        %1670 = vmatpush1.msra.mxu0 0.0
        %1671 = vmatprep.subr.mxu0 0.0
        %1672 = vmatpush1.msra.mxu0 0.0
        %1673 = vmatprep.subr.mxu0 0.0
        %1674 = vmatpush1.msra.mxu0 0.0
        %1675 = vmatprep.mubr.f32.mxu0 0.0
        %v1676 = vand.u32 %v1336, 4294901760
        %v1677 = vsub.f32 %v1336, %v1676
        %1678 = vmatmul.mubr.f32.gmra.mrb[0].mxu0 %v1677
        %v1679 = vpop.f32.mrb[0].mxu0
        %v1680 = vadd.f32 %v1576, %v1679
        %v1681 = vpop.f32.mrb[0].mxu0
        %1682 = vdwg.mxu0
        %1683 = vmatprep.subr.mxu0 0.0
        %v1684 = vand.u32 %v219, 4294901760
        %1685 = vmatpush1.msra.mxu0 %v1684
        %1686 = vmatprep.subr.mxu0 0.0
        %v1687 = vand.u32 %v220, 4294901760
        %1688 = vmatpush1.msra.mxu0 %v1687
        %1689 = vmatprep.subr.mxu0 0.0
        %v1690 = vand.u32 %v221, 4294901760
        %1691 = vmatpush1.msra.mxu0 %v1690
        %1692 = vmatprep.subr.mxu0 0.0
        %v1693 = vand.u32 %v222, 4294901760
        %1694 = vmatpush1.msra.mxu0 %v1693
        %1695 = vmatprep.subr.mxu0 0.0
        %v1696 = vand.u32 %v223, 4294901760
        %1697 = vmatpush1.msra.mxu0 %v1696
        %1698 = vmatprep.subr.mxu0 0.0
        %v1699 = vand.u32 %v224, 4294901760
        %1700 = vmatpush1.msra.mxu0 %v1699
        %1701 = vmatprep.subr.mxu0 0.0
        %v1702 = vand.u32 %v225, 4294901760
        %1703 = vmatpush1.msra.mxu0 %v1702
        %1704 = vmatprep.subr.mxu0 0.0
        %v1705 = vand.u32 %v226, 4294901760
        %1706 = vmatpush1.msra.mxu0 %v1705
        %1707 = vmatprep.subr.mxu0 0.0
        %v1708 = vand.u32 %v227, 4294901760
        %1709 = vmatpush1.msra.mxu0 %v1708
        %1710 = vmatprep.subr.mxu0 0.0
        %v1711 = vand.u32 %v228, 4294901760
        %1712 = vmatpush1.msra.mxu0 %v1711
        %1713 = vmatprep.subr.mxu0 0.0
        %v1714 = vand.u32 %v229, 4294901760
        %1715 = vmatpush1.msra.mxu0 %v1714
        %1716 = vmatprep.subr.mxu0 0.0
        %v1717 = vand.u32 %v230, 4294901760
        %1718 = vmatpush1.msra.mxu0 %v1717
        %1719 = vmatprep.subr.mxu0 0.0
        %v1720 = vand.u32 %v231, 4294901760
        %1721 = vmatpush1.msra.mxu0 %v1720
        %1722 = vmatprep.subr.mxu0 0.0
        %v1723 = vand.u32 %v232, 4294901760
        %1724 = vmatpush1.msra.mxu0 %v1723
        %1725 = vmatprep.subr.mxu0 0.0
        %v1726 = vand.u32 %v233, 4294901760
        %1727 = vmatpush1.msra.mxu0 %v1726
        %1728 = vmatprep.subr.mxu0 0.0
        %v1729 = vand.u32 %v234, 4294901760
        %1730 = vmatpush1.msra.mxu0 %v1729
        %1731 = vmatprep.subr.mxu0 0.0
        %1732 = vmatpush1.msra.mxu0 0.0
        %1733 = vmatprep.subr.mxu0 0.0
        %1734 = vmatpush1.msra.mxu0 0.0
        %1735 = vmatprep.subr.mxu0 0.0
        %1736 = vmatpush1.msra.mxu0 0.0
        %1737 = vmatprep.subr.mxu0 0.0
        %1738 = vmatpush1.msra.mxu0 0.0
        %1739 = vmatprep.subr.mxu0 0.0
        %1740 = vmatpush1.msra.mxu0 0.0
        %1741 = vmatprep.subr.mxu0 0.0
        %1742 = vmatpush1.msra.mxu0 0.0
        %1743 = vmatprep.subr.mxu0 0.0
        %1744 = vmatpush1.msra.mxu0 0.0
        %1745 = vmatprep.subr.mxu0 0.0
        %1746 = vmatpush1.msra.mxu0 0.0
        %1747 = vmatprep.subr.mxu0 0.0
        %1748 = vmatpush1.msra.mxu0 0.0
        %1749 = vmatprep.subr.mxu0 0.0
        %1750 = vmatpush1.msra.mxu0 0.0
        %1751 = vmatprep.subr.mxu0 0.0
        %1752 = vmatpush1.msra.mxu0 0.0
        %1753 = vmatprep.subr.mxu0 0.0
        %1754 = vmatpush1.msra.mxu0 0.0
        %1755 = vmatprep.subr.mxu0 0.0
        %1756 = vmatpush1.msra.mxu0 0.0
        %1757 = vmatprep.subr.mxu0 0.0
        %1758 = vmatpush1.msra.mxu0 0.0
        %1759 = vmatprep.subr.mxu0 0.0
        %1760 = vmatpush1.msra.mxu0 0.0
        %1761 = vmatprep.subr.mxu0 0.0
        %1762 = vmatpush1.msra.mxu0 0.0
        %1763 = vmatprep.mubr.f32.mxu0 0.0
        %v1764 = vand.u32 %v1336, 4294901760
        %v1765 = vsub.f32 %v1336, %v1764
        %v1766 = vand.u32 %v1765, 4294901760
        %1767 = vmatmul.mubr.f32.gmra.mrb[0].mxu0 %v1766
        %v1768 = vpop.f32.mrb[0].mxu0
        %v1769 = vadd.f32 %v1680, %v1768
        %v1770 = vpop.f32.mrb[0].mxu0
        %1771 = vdwg.mxu0
        %1772 = vmatprep.subr.mxu0 0.0
        %v1773 = vand.u32 %v219, 4294901760
        %v1774 = vsub.f32 %v219, %v1773
        %v1775 = vand.u32 %v1774, 4294901760
        %1776 = vmatpush1.msra.mxu0 %v1775
        %1777 = vmatprep.subr.mxu0 0.0
        %v1778 = vand.u32 %v220, 4294901760
        %v1779 = vsub.f32 %v220, %v1778
        %v1780 = vand.u32 %v1779, 4294901760
        %1781 = vmatpush1.msra.mxu0 %v1780
        %1782 = vmatprep.subr.mxu0 0.0
        %v1783 = vand.u32 %v221, 4294901760
        %v1784 = vsub.f32 %v221, %v1783
        %v1785 = vand.u32 %v1784, 4294901760
        %1786 = vmatpush1.msra.mxu0 %v1785
        %1787 = vmatprep.subr.mxu0 0.0
        %v1788 = vand.u32 %v222, 4294901760
        %v1789 = vsub.f32 %v222, %v1788
        %v1790 = vand.u32 %v1789, 4294901760
        %1791 = vmatpush1.msra.mxu0 %v1790
        %1792 = vmatprep.subr.mxu0 0.0
        %v1793 = vand.u32 %v223, 4294901760
        %v1794 = vsub.f32 %v223, %v1793
        %v1795 = vand.u32 %v1794, 4294901760
        %1796 = vmatpush1.msra.mxu0 %v1795
        %1797 = vmatprep.subr.mxu0 0.0
        %v1798 = vand.u32 %v224, 4294901760
        %v1799 = vsub.f32 %v224, %v1798
        %v1800 = vand.u32 %v1799, 4294901760
        %1801 = vmatpush1.msra.mxu0 %v1800
        %1802 = vmatprep.subr.mxu0 0.0
        %v1803 = vand.u32 %v225, 4294901760
        %v1804 = vsub.f32 %v225, %v1803
        %v1805 = vand.u32 %v1804, 4294901760
        %1806 = vmatpush1.msra.mxu0 %v1805
        %1807 = vmatprep.subr.mxu0 0.0
        %v1808 = vand.u32 %v226, 4294901760
        %v1809 = vsub.f32 %v226, %v1808
        %v1810 = vand.u32 %v1809, 4294901760
        %1811 = vmatpush1.msra.mxu0 %v1810
        %1812 = vmatprep.subr.mxu0 0.0
        %v1813 = vand.u32 %v227, 4294901760
        %v1814 = vsub.f32 %v227, %v1813
        %v1815 = vand.u32 %v1814, 4294901760
        %1816 = vmatpush1.msra.mxu0 %v1815
        %1817 = vmatprep.subr.mxu0 0.0
        %v1818 = vand.u32 %v228, 4294901760
        %v1819 = vsub.f32 %v228, %v1818
        %v1820 = vand.u32 %v1819, 4294901760
        %1821 = vmatpush1.msra.mxu0 %v1820
        %1822 = vmatprep.subr.mxu0 0.0
        %v1823 = vand.u32 %v229, 4294901760
        %v1824 = vsub.f32 %v229, %v1823
        %v1825 = vand.u32 %v1824, 4294901760
        %1826 = vmatpush1.msra.mxu0 %v1825
        %1827 = vmatprep.subr.mxu0 0.0
        %v1828 = vand.u32 %v230, 4294901760
        %v1829 = vsub.f32 %v230, %v1828
        %v1830 = vand.u32 %v1829, 4294901760
        %1831 = vmatpush1.msra.mxu0 %v1830
        %1832 = vmatprep.subr.mxu0 0.0
        %v1833 = vand.u32 %v231, 4294901760
        %v1834 = vsub.f32 %v231, %v1833
        %v1835 = vand.u32 %v1834, 4294901760
        %1836 = vmatpush1.msra.mxu0 %v1835
        %1837 = vmatprep.subr.mxu0 0.0
        %v1838 = vand.u32 %v232, 4294901760
        %v1839 = vsub.f32 %v232, %v1838
        %v1840 = vand.u32 %v1839, 4294901760
        %1841 = vmatpush1.msra.mxu0 %v1840
        %1842 = vmatprep.subr.mxu0 0.0
        %v1843 = vand.u32 %v233, 4294901760
        %v1844 = vsub.f32 %v233, %v1843
        %v1845 = vand.u32 %v1844, 4294901760
        %1846 = vmatpush1.msra.mxu0 %v1845
        %1847 = vmatprep.subr.mxu0 0.0
        %v1848 = vand.u32 %v234, 4294901760
        %v1849 = vsub.f32 %v234, %v1848
        %v1850 = vand.u32 %v1849, 4294901760
        %1851 = vmatpush1.msra.mxu0 %v1850
        %1852 = vmatprep.subr.mxu0 0.0
        %1853 = vmatpush1.msra.mxu0 0.0
        %1854 = vmatprep.subr.mxu0 0.0
        %1855 = vmatpush1.msra.mxu0 0.0
        %1856 = vmatprep.subr.mxu0 0.0
        %1857 = vmatpush1.msra.mxu0 0.0
        %1858 = vmatprep.subr.mxu0 0.0
        %1859 = vmatpush1.msra.mxu0 0.0
        %1860 = vmatprep.subr.mxu0 0.0
        %1861 = vmatpush1.msra.mxu0 0.0
        %1862 = vmatprep.subr.mxu0 0.0
        %1863 = vmatpush1.msra.mxu0 0.0
        %1864 = vmatprep.subr.mxu0 0.0
        %1865 = vmatpush1.msra.mxu0 0.0
        %1866 = vmatprep.subr.mxu0 0.0
        %1867 = vmatpush1.msra.mxu0 0.0
        %1868 = vmatprep.subr.mxu0 0.0
        %1869 = vmatpush1.msra.mxu0 0.0
        %1870 = vmatprep.subr.mxu0 0.0
        %1871 = vmatpush1.msra.mxu0 0.0
        %1872 = vmatprep.subr.mxu0 0.0
        %1873 = vmatpush1.msra.mxu0 0.0
        %1874 = vmatprep.subr.mxu0 0.0
        %1875 = vmatpush1.msra.mxu0 0.0
        %1876 = vmatprep.subr.mxu0 0.0
        %1877 = vmatpush1.msra.mxu0 0.0
        %1878 = vmatprep.subr.mxu0 0.0
        %1879 = vmatpush1.msra.mxu0 0.0
        %1880 = vmatprep.subr.mxu0 0.0
        %1881 = vmatpush1.msra.mxu0 0.0
        %1882 = vmatprep.subr.mxu0 0.0
        %1883 = vmatpush1.msra.mxu0 0.0
        %1884 = vmatprep.mubr.f32.mxu0 0.0
        %v1885 = vand.u32 %v1336, 4294901760
        %1886 = vmatmul.mubr.f32.gmra.mrb[0].mxu0 %v1885
        %v1887 = vpop.f32.mrb[0].mxu0
        %v1888 = vadd.f32 %v1769, %v1887
        %v1889 = vpop.f32.mrb[0].mxu0
        %1890 = vdwg.mxu0
        %1891 = vmatprep.subr.mxu0 0.0
        %v1892 = vand.u32 %v219, 4294901760
        %1893 = vmatpush1.msra.mxu0 %v1892
        %1894 = vmatprep.subr.mxu0 0.0
        %v1895 = vand.u32 %v220, 4294901760
        %1896 = vmatpush1.msra.mxu0 %v1895
        %1897 = vmatprep.subr.mxu0 0.0
        %v1898 = vand.u32 %v221, 4294901760
        %1899 = vmatpush1.msra.mxu0 %v1898
        %1900 = vmatprep.subr.mxu0 0.0
        %v1901 = vand.u32 %v222, 4294901760
        %1902 = vmatpush1.msra.mxu0 %v1901
        %1903 = vmatprep.subr.mxu0 0.0
        %v1904 = vand.u32 %v223, 4294901760
        %1905 = vmatpush1.msra.mxu0 %v1904
        %1906 = vmatprep.subr.mxu0 0.0
        %v1907 = vand.u32 %v224, 4294901760
        %1908 = vmatpush1.msra.mxu0 %v1907
        %1909 = vmatprep.subr.mxu0 0.0
        %v1910 = vand.u32 %v225, 4294901760
        %1911 = vmatpush1.msra.mxu0 %v1910
        %1912 = vmatprep.subr.mxu0 0.0
        %v1913 = vand.u32 %v226, 4294901760
        %1914 = vmatpush1.msra.mxu0 %v1913
        %1915 = vmatprep.subr.mxu0 0.0
        %v1916 = vand.u32 %v227, 4294901760
        %1917 = vmatpush1.msra.mxu0 %v1916
        %1918 = vmatprep.subr.mxu0 0.0
        %v1919 = vand.u32 %v228, 4294901760
        %1920 = vmatpush1.msra.mxu0 %v1919
        %1921 = vmatprep.subr.mxu0 0.0
        %v1922 = vand.u32 %v229, 4294901760
        %1923 = vmatpush1.msra.mxu0 %v1922
        %1924 = vmatprep.subr.mxu0 0.0
        %v1925 = vand.u32 %v230, 4294901760
        %1926 = vmatpush1.msra.mxu0 %v1925
        %1927 = vmatprep.subr.mxu0 0.0
        %v1928 = vand.u32 %v231, 4294901760
        %1929 = vmatpush1.msra.mxu0 %v1928
        %1930 = vmatprep.subr.mxu0 0.0
        %v1931 = vand.u32 %v232, 4294901760
        %1932 = vmatpush1.msra.mxu0 %v1931
        %1933 = vmatprep.subr.mxu0 0.0
        %v1934 = vand.u32 %v233, 4294901760
        %1935 = vmatpush1.msra.mxu0 %v1934
        %1936 = vmatprep.subr.mxu0 0.0
        %v1937 = vand.u32 %v234, 4294901760
        %1938 = vmatpush1.msra.mxu0 %v1937
        %1939 = vmatprep.subr.mxu0 0.0
        %1940 = vmatpush1.msra.mxu0 0.0
        %1941 = vmatprep.subr.mxu0 0.0
        %1942 = vmatpush1.msra.mxu0 0.0
        %1943 = vmatprep.subr.mxu0 0.0
        %1944 = vmatpush1.msra.mxu0 0.0
        %1945 = vmatprep.subr.mxu0 0.0
        %1946 = vmatpush1.msra.mxu0 0.0
        %1947 = vmatprep.subr.mxu0 0.0
        %1948 = vmatpush1.msra.mxu0 0.0
        %1949 = vmatprep.subr.mxu0 0.0
        %1950 = vmatpush1.msra.mxu0 0.0
        %1951 = vmatprep.subr.mxu0 0.0
        %1952 = vmatpush1.msra.mxu0 0.0
        %1953 = vmatprep.subr.mxu0 0.0
        %1954 = vmatpush1.msra.mxu0 0.0
        %1955 = vmatprep.subr.mxu0 0.0
        %1956 = vmatpush1.msra.mxu0 0.0
        %1957 = vmatprep.subr.mxu0 0.0
        %1958 = vmatpush1.msra.mxu0 0.0
        %1959 = vmatprep.subr.mxu0 0.0
        %1960 = vmatpush1.msra.mxu0 0.0
        %1961 = vmatprep.subr.mxu0 0.0
        %1962 = vmatpush1.msra.mxu0 0.0
        %1963 = vmatprep.subr.mxu0 0.0
        %1964 = vmatpush1.msra.mxu0 0.0
        %1965 = vmatprep.subr.mxu0 0.0
        %1966 = vmatpush1.msra.mxu0 0.0
        %1967 = vmatprep.subr.mxu0 0.0
        %1968 = vmatpush1.msra.mxu0 0.0
        %1969 = vmatprep.subr.mxu0 0.0
        %1970 = vmatpush1.msra.mxu0 0.0
        %1971 = vmatprep.mubr.f32.mxu0 0.0
        %v1972 = vand.u32 %v1336, 4294901760
        %1973 = vmatmul.mubr.f32.gmra.mrb[0].mxu0 %v1972
        %v1974 = vpop.f32.mrb[0].mxu0
        %v1975 = vadd.f32 %v1888, %v1974
        %v1976 = vpop.f32.mrb[0].mxu0
        %1977 = vdwg.mxu0
        %v1978 = vmul.f32 %v1975, 0.06666667
        %v1979 = vmax.f32 %v1978, 0.0
        %v1980 = vrsqrt.pop %v1979
        %v1981 = vmul.f32 %v1979, %v1980
        %vm1982 = vcmp.eq.f32.partialorder %v1979, inf
        %v1983 = vsel %vm1982, %v1979, %v1981
        %vm1984 = vcmp.eq.f32.partialorder %v1979, 0.0
        %v1985 = vand.u32 %v1979, 2147483648
        %v1986 = vsel %vm1984, %v1985, %v1983
        %1987 = vst.msk [vmem:[%s131] sm:$0xff] %vm885, %v1986
        %p1988 = scmp.lt.s32.totalorder %s15, 1
        %s1989 = scalar_select %p1988, %s15, 1
        %s1990 = smul.addr %s1989, 8
        %s1991 = scalar_lea.vmem %s1, %s1990
        // Predicated region
        $region29: #{tpu_custom_call.1} parent=23 // pred_check
          %p1992 = pneg %p59
        $region30: #{tpu_custom_call.1} parent=23 // pred_check_branch
          %1994 = sbr.rel (%p1992) target = $region32
        $region31: #{tpu_custom_call.1} parent=23 // pred_region
          _
        $region32: #{tpu_custom_call.1} parent=23 // pred_fallthru
          _
      $region24: #{tpu_custom_call.1} parent=5 // pred_fallthru
        _
      %p1995 = scmp.le.s32.totalorder 2, %s10
      // Predicated region
      $region33: #{tpu_custom_call.1} parent=5 // pred_check
        %p1996 = pneg %p1995
      $region34: #{tpu_custom_call.1} parent=5 // pred_check_branch
        %1998 = sbr.rel (%p1996) target = $region36
      $region35: #{tpu_custom_call.1} parent=5 // pred_region
        %s1999 = ssub.s32 %s10, 2
        // Predicated region
        $region37: #{tpu_custom_call.1} parent=35 // pred_check
          %p2000 = pneg %p65
        $region38: #{tpu_custom_call.1} parent=35 // pred_check_branch
          %2002 = sbr.rel (%p2000) target = $region40
        $region39: #{tpu_custom_call.1} parent=35 // pred_region
          %p2003 = scmp.lt.s32.totalorder %s16, 1
          %s2004 = scalar_select %p2003, %s16, 1
          %s2005 = smul.addr %s2004, 8
          %s2006 = scalar_lea.vmem %s1, %s2005
        $region40: #{tpu_custom_call.1} parent=35 // pred_fallthru
          _
      $region36: #{tpu_custom_call.1} parent=5 // pred_fallthru
        _
    $region6: #{tpu_custom_call.1} parent=1 // loop_footer
      %s14 = sadd.s32 1, %s10
    $region7: #{tpu_custom_call.1} parent=1 // loop_footer_branch
      %9 = sbr.rel target = $region3
    $region8: #{tpu_custom_call.1} parent=1 // loop_exit
      _
    %2007 = vsyncpa [#allocation3], 1
    %s2008 = scalar_lea.sflag [#allocation3], 1
    %2009 = vsyncpa %s2008, 1

</llo_original>
